<compile_context>
chip_gen: v7x
topology: tpu7x:2x2x1
jax: 0.10.0
libtpu: 0.0.40
codegen_flags: <defaults>
</compile_context>

<pallas_src>
import math
import functools

import jax
import jax.numpy as jnp
from jax import lax
from jax.experimental import pallas as pl
from jax.experimental.pallas import tpu as pltpu


# ----------------------------------------------------------------------------
# Kernel: one grid step handles one batch element (full L x H block).
# ----------------------------------------------------------------------------
def _mha_kernel(xq_ref, xk_ref, xv_ref, w_ref, b_ref, o_ref, *,
                num_heads, scale):
    """Refs (per grid step b):
      xq/xk/xv_ref : (L, H)    activations for batch element b (float32)
      w_ref        : (4, H, H) stacked (Wq^T, Wk^T, Wv^T, Wo^T), f32 or bf16
      b_ref        : (4, H)    stacked (bq, bk, bv, bo), float32
      o_ref        : (L, H)    output for batch element b (float32)
    """
    L, H = o_ref.shape
    d = H // num_heads
    cdt = w_ref.dtype          # MXU operand dtype (f32 or bf16); accum is f32.

    b_all = b_ref[...]                                   # (4, H)
    bq, bk, bv, bo = b_all[0:1], b_all[1:2], b_all[2:3], b_all[3:4]
    wq, wk, wv, wo = w_ref[0], w_ref[1], w_ref[2], w_ref[3]   # (H, H) each

    # Projections: lane-dense (L, H) @ (H, H), f32 accumulation.
    Qf = jnp.dot(xq_ref[...].astype(cdt), wq,
                 preferred_element_type=jnp.float32) + bq
    Kf = jnp.dot(xk_ref[...].astype(cdt), wk,
                 preferred_element_type=jnp.float32) + bk
    Vf = jnp.dot(xv_ref[...].astype(cdt), wv,
                 preferred_element_type=jnp.float32) + bv

    # Split heads via static lane slices, batch them along a leading axis.
    def split_heads(x):                                  # (L, H) -> (nh, L, d)
        return jnp.stack([x[:, h * d:(h + 1) * d] for h in range(num_heads)],
                         axis=0)

    Qh, Kh, Vh = split_heads(Qf), split_heads(Kf), split_heads(Vf)

    # Scores: batched (nh, Lq, d) x (nh, Lk, d) -> (nh, Lq, Lk), contracting
    # the last dims (no explicit transpose of K).
    s = lax.dot_general(Qh.astype(cdt), Kh.astype(cdt),
                        (((2,), (2,)), ((0,), (0,))),
                        preferred_element_type=jnp.float32) * scale

    # clustering=True -> softmax over the QUERY axis (axis=1). All f32.
    m = jnp.max(s, axis=1, keepdims=True)
    p = jnp.exp(s - m)
    a = p / jnp.sum(p, axis=1, keepdims=True)

    # Batched (nh, Lq, Lk) x (nh, Lk, d) -> (nh, Lq, d).
    oh = lax.dot_general(a.astype(cdt), Vh.astype(cdt),
                         (((2,), (1,)), ((0,), (0,))),
                         preferred_element_type=jnp.float32)

    # Merge heads back into one lane-dense (L, H) tile, then a single K=H
    # output projection.
    o_full = jnp.concatenate([oh[h] for h in range(num_heads)], axis=1)
    y = jnp.dot(o_full.astype(cdt), wo,
                preferred_element_type=jnp.float32) + bo
    o_ref[...] = y.astype(o_ref.dtype)


# ----------------------------------------------------------------------------
# One-time parameter packing (keep OUT of the jit'd per-call path).
# ----------------------------------------------------------------------------
def prepare_params(params, mxu_dtype=jnp.float32):
    """mxu_dtype=jnp.bfloat16 is the v6e/v7x throughput path; f32 for exactness
    (and the v5e default)."""
    w_stack = jnp.stack([params["wq"].T, params["wk"].T,
                         params["wv"].T, params["wo"].T],
                        axis=0).astype(mxu_dtype)         # (4, H, H)
    b_stack = jnp.stack([params["bq"], params["bk"],
                         params["bv"], params["bo"]],
                        axis=0).astype(jnp.float32)       # (4, H)
    return {"w": w_stack, "b": b_stack}


# ----------------------------------------------------------------------------
# Wrapper
# ----------------------------------------------------------------------------
def multi_head_attention(x_q, x_k, x_v, mask, prepared, *, num_heads):
    """Forward matching MultiHeadAttention(clustering=True,
    masked_attention=False, dropout=0.0). `mask` is unused in this config."""
    del mask
    B, L, H = x_q.shape
    scale = 1.0 / math.sqrt(H)
    w_stack, b_stack = prepared["w"], prepared["b"]

    # Advisory cost estimate (helps XLA schedule around this tiny call).
    flops = 4 * 2 * B * L * H * H + 2 * 2 * B * L * L * H
    bytes_accessed = (4 * 4 * B * L * H                   # 3 inputs + output
                      + w_stack.size * w_stack.dtype.itemsize
                      + b_stack.size * 4)
    cost = pl.CostEstimate(flops=flops,
                           transcendentals=B * num_heads * L * L,
                           bytes_accessed=bytes_accessed)

    kernel = functools.partial(_mha_kernel, num_heads=num_heads, scale=scale)

    out = pl.pallas_call(
        kernel,
        out_shape=jax.ShapeDtypeStruct((B * L, H), jnp.float32),
        grid=(B,),
        in_specs=[
            pl.BlockSpec((L, H), lambda b: (b, 0)),
            pl.BlockSpec((L, H), lambda b: (b, 0)),
            pl.BlockSpec((L, H), lambda b: (b, 0)),
            pl.BlockSpec((4, H, H), lambda b: (0, 0, 0)),   # weights resident
            pl.BlockSpec((4, H), lambda b: (0, 0)),         # biases resident
        ],
        out_specs=pl.BlockSpec((L, H), lambda b: (b, 0)),
        compiler_params=pltpu.CompilerParams(
            dimension_semantics=("parallel",)),   # v7x: 2nd TC takes half of B
        cost_estimate=cost,
    )(x_q.reshape(B * L, H), x_k.reshape(B * L, H), x_v.reshape(B * L, H),
      w_stack, b_stack)

    return out.reshape(B, L, H)


# ----------------------------------------------------------------------------
# Pure-JAX reference (mirrors the PyTorch forward, HIGHEST matmul precision).
# ----------------------------------------------------------------------------
def reference(x_q, x_k, x_v, params, *, num_heads):
    H = params["wq"].shape[0]
    pr = lax.Precision.HIGHEST
    Q = jnp.einsum("blh,oh->blo", x_q, params["wq"], precision=pr) + params["bq"]
    K = jnp.einsum("blh,oh->blo", x_k, params["wk"], precision=pr) + params["bk"]
    V = jnp.einsum("blh,oh->blo", x_v, params["wv"], precision=pr) + params["bv"]
    Qh = jnp.concatenate(jnp.split(Q, num_heads, axis=2), axis=0)
    Kh = jnp.concatenate(jnp.split(K, num_heads, axis=2), axis=0)
    Vh = jnp.concatenate(jnp.split(V, num_heads, axis=2), axis=0)
    s = jnp.einsum("bqd,bkd->bqk", Qh, Kh, precision=pr) / math.sqrt(H)
    A = jax.nn.softmax(s, axis=1)                 # clustering=True -> dim=1
    o = jnp.einsum("bqk,bkd->bqd", A, Vh, precision=pr)
    o = jnp.concatenate(jnp.split(o, num_heads, axis=0), axis=2)
    return jnp.einsum("blh,oh->blo", o, params["wo"], precision=pr) + params["bo"]


# ----------------------------------------------------------------------------
# Main
# ----------------------------------------------------------------------------
if __name__ == "__main__":
    B, L, HIDDEN, HEADS = 2, 16, 128, 4

    key = jax.random.PRNGKey(0)
    ks = jax.random.split(key, 11)

    # PyTorch nn.Linear default init: U(-1/sqrt(fan_in), 1/sqrt(fan_in))
    bound = 1.0 / math.sqrt(HIDDEN)

    def init_w(k):
        return jax.random.uniform(k, (HIDDEN, HIDDEN), jnp.float32, -bound, bound)

    def init_b(k):
        return jax.random.uniform(k, (HIDDEN,), jnp.float32, -bound, bound)

    params = {
        "wq": init_w(ks[0]), "bq": init_b(ks[1]),
        "wk": init_w(ks[2]), "bk": init_b(ks[3]),
        "wv": init_w(ks[4]), "bv": init_b(ks[5]),
        "wo": init_w(ks[6]), "bo": init_b(ks[7]),
    }

    x_q = jax.random.normal(ks[8], (B, L, HIDDEN), jnp.float32)
    x_k = jax.random.normal(ks[9], (B, L, HIDDEN), jnp.float32)
    x_v = jax.random.normal(ks[10], (B, L, HIDDEN), jnp.float32)
    mask = jnp.ones((B, L), dtype=jnp.bool_)      # unused for default flags

    ref = reference(x_q, x_k, x_v, params, num_heads=HEADS)

    fwd = jax.jit(functools.partial(multi_head_attention, num_heads=HEADS))

    # f32 MXU-operand path (exact; what you would ship on v5e).
    prep_f32 = prepare_params(params, mxu_dtype=jnp.float32)
    out_f32 = jax.block_until_ready(fwd(x_q, x_k, x_v, mask, prep_f32))
    assert out_f32.shape == (B, L, HIDDEN)
    assert jnp.allclose(out_f32, ref, atol=5e-3, rtol=5e-3), "f32 kernel mismatch"

    # bf16 MXU-operand path (v6e/v7x throughput); softmax/accum remain f32,
    # so only operand-rounding error vs. the f32 reference.
    prep_bf16 = prepare_params(params, mxu_dtype=jnp.bfloat16)
    out_bf16 = jax.block_until_ready(fwd(x_q, x_k, x_v, mask, prep_bf16))
    assert jnp.allclose(out_bf16, ref, atol=5e-2, rtol=5e-2), "bf16 kernel mismatch"

    print("KERNEL_OK")
</pallas_src>

<mosaic_0001>
module attributes {stable_mosaic.version = 11 : i64} {
  func.func @_mha_kernel(%arg0: i32, %arg1: memref<16x128xf32, #tpu.memory_space<vmem>>, %arg2: memref<16x128xf32, #tpu.memory_space<vmem>>, %arg3: memref<16x128xf32, #tpu.memory_space<vmem>>, %arg4: memref<4x128x128xf32, #tpu.memory_space<vmem>>, %arg5: memref<4x128xf32, #tpu.memory_space<vmem>>, %arg6: memref<16x128xf32, #tpu.memory_space<vmem>>) attributes {dimension_semantics = [#tpu.dimension_semantics<parallel>], iteration_bounds = array<i64: 2>, scalar_prefetch = 0 : i64, scratch_operands = 0 : i64, tpu.core_type = #tpu.core_type<tc>, window_params = [{transform_indices = @transform_0, window_bounds = array<i64: 16, 128>}, {transform_indices = @transform_1, window_bounds = array<i64: 16, 128>}, {transform_indices = @transform_2, window_bounds = array<i64: 16, 128>}, {pipeline_mode = #tpu.pipeline_mode<synchronous>, transform_indices = @transform_3, window_bounds = array<i64: 4, 128, 128>}, {pipeline_mode = #tpu.pipeline_mode<synchronous>, transform_indices = @transform_4, window_bounds = array<i64: 4, 128>}, {transform_indices = @transform_5, window_bounds = array<i64: 16, 128>}]} {
    %c0 = arith.constant 0 : index
    %c0_0 = arith.constant 0 : index
    %0 = vector.load %arg5[%c0, %c0_0] : memref<4x128xf32, #tpu.memory_space<vmem>>, vector<4x128xf32>
    %1 = vector.extract_strided_slice %0 {offsets = [0, 0], sizes = [1, 128], strides = [1, 1]} : vector<4x128xf32> to vector<1x128xf32>
    %2 = vector.extract_strided_slice %0 {offsets = [1, 0], sizes = [1, 128], strides = [1, 1]} : vector<4x128xf32> to vector<1x128xf32>
    %3 = vector.extract_strided_slice %0 {offsets = [2, 0], sizes = [1, 128], strides = [1, 1]} : vector<4x128xf32> to vector<1x128xf32>
    %4 = vector.extract_strided_slice %0 {offsets = [3, 0], sizes = [1, 128], strides = [1, 1]} : vector<4x128xf32> to vector<1x128xf32>
    %c0_1 = arith.constant 0 : index
    %c0_2 = arith.constant 0 : index
    %c0_3 = arith.constant 0 : index
    %5 = vector.load %arg4[%c0_1, %c0_2, %c0_3] : memref<4x128x128xf32, #tpu.memory_space<vmem>>, vector<1x128x128xf32>
    %6 = vector.shape_cast %5 : vector<1x128x128xf32> to vector<128x128xf32>
    %c1 = arith.constant 1 : index
    %c0_4 = arith.constant 0 : index
    %c0_5 = arith.constant 0 : index
    %7 = vector.load %arg4[%c1, %c0_4, %c0_5] : memref<4x128x128xf32, #tpu.memory_space<vmem>>, vector<1x128x128xf32>
    %8 = vector.shape_cast %7 : vector<1x128x128xf32> to vector<128x128xf32>
    %c2 = arith.constant 2 : index
    %c0_6 = arith.constant 0 : index
    %c0_7 = arith.constant 0 : index
    %9 = vector.load %arg4[%c2, %c0_6, %c0_7] : memref<4x128x128xf32, #tpu.memory_space<vmem>>, vector<1x128x128xf32>
    %10 = vector.shape_cast %9 : vector<1x128x128xf32> to vector<128x128xf32>
    %c3 = arith.constant 3 : index
    %c0_8 = arith.constant 0 : index
    %c0_9 = arith.constant 0 : index
    %11 = vector.load %arg4[%c3, %c0_8, %c0_9] : memref<4x128x128xf32, #tpu.memory_space<vmem>>, vector<1x128x128xf32>
    %12 = vector.shape_cast %11 : vector<1x128x128xf32> to vector<128x128xf32>
    %c0_10 = arith.constant 0 : index
    %c0_11 = arith.constant 0 : index
    %13 = vector.load %arg1[%c0_10, %c0_11] : memref<16x128xf32, #tpu.memory_space<vmem>>, vector<16x128xf32>
    %cst = arith.constant dense<0.000000e+00> : vector<16x128xf32>
    %14 = tpu.matmul %13, %6, %cst {dimension_numbers = #tpu.dot_dimension_numbers<[1], [0], [0], [1], [0, 0, 1, 1], [], []>} : vector<16x128xf32>, vector<128x128xf32>, vector<16x128xf32> -> vector<16x128xf32>
    %15 = vector.broadcast %1 : vector<1x128xf32> to vector<16x128xf32>
    %16 = arith.addf %14, %15 : vector<16x128xf32>
    %c0_12 = arith.constant 0 : index
    %c0_13 = arith.constant 0 : index
    %17 = vector.load %arg2[%c0_12, %c0_13] : memref<16x128xf32, #tpu.memory_space<vmem>>, vector<16x128xf32>
    %cst_14 = arith.constant dense<0.000000e+00> : vector<16x128xf32>
    %18 = tpu.matmul %17, %8, %cst_14 {dimension_numbers = #tpu.dot_dimension_numbers<[1], [0], [0], [1], [0, 0, 1, 1], [], []>} : vector<16x128xf32>, vector<128x128xf32>, vector<16x128xf32> -> vector<16x128xf32>
    %19 = vector.broadcast %2 : vector<1x128xf32> to vector<16x128xf32>
    %20 = arith.addf %18, %19 : vector<16x128xf32>
    %c0_15 = arith.constant 0 : index
    %c0_16 = arith.constant 0 : index
    %21 = vector.load %arg3[%c0_15, %c0_16] : memref<16x128xf32, #tpu.memory_space<vmem>>, vector<16x128xf32>
    %cst_17 = arith.constant dense<0.000000e+00> : vector<16x128xf32>
    %22 = tpu.matmul %21, %10, %cst_17 {dimension_numbers = #tpu.dot_dimension_numbers<[1], [0], [0], [1], [0, 0, 1, 1], [], []>} : vector<16x128xf32>, vector<128x128xf32>, vector<16x128xf32> -> vector<16x128xf32>
    %23 = vector.broadcast %3 : vector<1x128xf32> to vector<16x128xf32>
    %24 = arith.addf %22, %23 : vector<16x128xf32>
    %25 = vector.extract_strided_slice %16 {offsets = [0, 0], sizes = [16, 32], strides = [1, 1]} : vector<16x128xf32> to vector<16x32xf32>
    %26 = vector.extract_strided_slice %16 {offsets = [0, 32], sizes = [16, 32], strides = [1, 1]} : vector<16x128xf32> to vector<16x32xf32>
    %27 = vector.extract_strided_slice %16 {offsets = [0, 64], sizes = [16, 32], strides = [1, 1]} : vector<16x128xf32> to vector<16x32xf32>
    %28 = vector.extract_strided_slice %16 {offsets = [0, 96], sizes = [16, 32], strides = [1, 1]} : vector<16x128xf32> to vector<16x32xf32>
    %29 = vector.shape_cast %25 : vector<16x32xf32> to vector<1x16x32xf32>
    %30 = vector.shape_cast %26 : vector<16x32xf32> to vector<1x16x32xf32>
    %31 = vector.shape_cast %27 : vector<16x32xf32> to vector<1x16x32xf32>
    %32 = vector.shape_cast %28 : vector<16x32xf32> to vector<1x16x32xf32>
    %33 = tpu.concatenate %29, %30, %31, %32 in 0 : vector<1x16x32xf32>, vector<1x16x32xf32>, vector<1x16x32xf32>, vector<1x16x32xf32> -> vector<4x16x32xf32>
    %34 = vector.extract_strided_slice %20 {offsets = [0, 0], sizes = [16, 32], strides = [1, 1]} : vector<16x128xf32> to vector<16x32xf32>
    %35 = vector.extract_strided_slice %20 {offsets = [0, 32], sizes = [16, 32], strides = [1, 1]} : vector<16x128xf32> to vector<16x32xf32>
    %36 = vector.extract_strided_slice %20 {offsets = [0, 64], sizes = [16, 32], strides = [1, 1]} : vector<16x128xf32> to vector<16x32xf32>
    %37 = vector.extract_strided_slice %20 {offsets = [0, 96], sizes = [16, 32], strides = [1, 1]} : vector<16x128xf32> to vector<16x32xf32>
    %38 = vector.shape_cast %34 : vector<16x32xf32> to vector<1x16x32xf32>
    %39 = vector.shape_cast %35 : vector<16x32xf32> to vector<1x16x32xf32>
    %40 = vector.shape_cast %36 : vector<16x32xf32> to vector<1x16x32xf32>
    %41 = vector.shape_cast %37 : vector<16x32xf32> to vector<1x16x32xf32>
    %42 = tpu.concatenate %38, %39, %40, %41 in 0 : vector<1x16x32xf32>, vector<1x16x32xf32>, vector<1x16x32xf32>, vector<1x16x32xf32> -> vector<4x16x32xf32>
    %43 = vector.extract_strided_slice %24 {offsets = [0, 0], sizes = [16, 32], strides = [1, 1]} : vector<16x128xf32> to vector<16x32xf32>
    %44 = vector.extract_strided_slice %24 {offsets = [0, 32], sizes = [16, 32], strides = [1, 1]} : vector<16x128xf32> to vector<16x32xf32>
    %45 = vector.extract_strided_slice %24 {offsets = [0, 64], sizes = [16, 32], strides = [1, 1]} : vector<16x128xf32> to vector<16x32xf32>
    %46 = vector.extract_strided_slice %24 {offsets = [0, 96], sizes = [16, 32], strides = [1, 1]} : vector<16x128xf32> to vector<16x32xf32>
    %47 = vector.shape_cast %43 : vector<16x32xf32> to vector<1x16x32xf32>
    %48 = vector.shape_cast %44 : vector<16x32xf32> to vector<1x16x32xf32>
    %49 = vector.shape_cast %45 : vector<16x32xf32> to vector<1x16x32xf32>
    %50 = vector.shape_cast %46 : vector<16x32xf32> to vector<1x16x32xf32>
    %51 = tpu.concatenate %47, %48, %49, %50 in 0 : vector<1x16x32xf32>, vector<1x16x32xf32>, vector<1x16x32xf32>, vector<1x16x32xf32> -> vector<4x16x32xf32>
    %cst_18 = arith.constant dense<0.000000e+00> : vector<4x16x16xf32>
    %52 = tpu.matmul %33, %42, %cst_18 {dimension_numbers = #tpu.dot_dimension_numbers<[2], [2], [1], [1], [0, 0, 0, 1, 1, 1], [0], [0]>} : vector<4x16x32xf32>, vector<4x16x32xf32>, vector<4x16x16xf32> -> vector<4x16x16xf32>
    %cst_19 = arith.constant 0.0883883461 : f32
    %53 = vector.broadcast %cst_19 : f32 to vector<4x16x16xf32>
    %54 = arith.mulf %52, %53 : vector<4x16x16xf32>
    %cst_20 = arith.constant dense<0xFF800000> : vector<4x16xf32>
    %55 = vector.multi_reduction <maximumf>, %54, %cst_20 [1] : vector<4x16x16xf32> to vector<4x16xf32>
    %56 = vector.shape_cast %55 : vector<4x16xf32> to vector<4x1x16xf32>
    %57 = vector.broadcast %56 : vector<4x1x16xf32> to vector<4x16x16xf32>
    %58 = arith.subf %54, %57 : vector<4x16x16xf32>
    %59 = math.exp %58 : vector<4x16x16xf32>
    %cst_21 = arith.constant dense<0.000000e+00> : vector<4x16xf32>
    %60 = vector.multi_reduction <add>, %59, %cst_21 [1] : vector<4x16x16xf32> to vector<4x16xf32>
    %61 = vector.shape_cast %60 : vector<4x16xf32> to vector<4x1x16xf32>
    %62 = vector.broadcast %61 : vector<4x1x16xf32> to vector<4x16x16xf32>
    %63 = arith.divf %59, %62 : vector<4x16x16xf32>
    %cst_22 = arith.constant dense<0.000000e+00> : vector<4x16x32xf32>
    %64 = tpu.matmul %63, %51, %cst_22 {dimension_numbers = #tpu.dot_dimension_numbers<[2], [1], [1], [2], [0, 0, 0, 1, 1, 2], [0], [0]>} : vector<4x16x16xf32>, vector<4x16x32xf32>, vector<4x16x32xf32> -> vector<4x16x32xf32>
    %65 = vector.extract_strided_slice %64 {offsets = [0, 0, 0], sizes = [1, 16, 32], strides = [1, 1, 1]} : vector<4x16x32xf32> to vector<1x16x32xf32>
    %66 = vector.shape_cast %65 : vector<1x16x32xf32> to vector<16x32xf32>
    %67 = vector.extract_strided_slice %64 {offsets = [1, 0, 0], sizes = [1, 16, 32], strides = [1, 1, 1]} : vector<4x16x32xf32> to vector<1x16x32xf32>
    %68 = vector.shape_cast %67 : vector<1x16x32xf32> to vector<16x32xf32>
    %69 = vector.extract_strided_slice %64 {offsets = [2, 0, 0], sizes = [1, 16, 32], strides = [1, 1, 1]} : vector<4x16x32xf32> to vector<1x16x32xf32>
    %70 = vector.shape_cast %69 : vector<1x16x32xf32> to vector<16x32xf32>
    %71 = vector.extract_strided_slice %64 {offsets = [3, 0, 0], sizes = [1, 16, 32], strides = [1, 1, 1]} : vector<4x16x32xf32> to vector<1x16x32xf32>
    %72 = vector.shape_cast %71 : vector<1x16x32xf32> to vector<16x32xf32>
    %73 = tpu.concatenate %66, %68, %70, %72 in 1 : vector<16x32xf32>, vector<16x32xf32>, vector<16x32xf32>, vector<16x32xf32> -> vector<16x128xf32>
    %cst_23 = arith.constant dense<0.000000e+00> : vector<16x128xf32>
    %74 = tpu.matmul %73, %12, %cst_23 {dimension_numbers = #tpu.dot_dimension_numbers<[1], [0], [0], [1], [0, 0, 1, 1], [], []>} : vector<16x128xf32>, vector<128x128xf32>, vector<16x128xf32> -> vector<16x128xf32>
    %75 = vector.broadcast %4 : vector<1x128xf32> to vector<16x128xf32>
    %76 = arith.addf %74, %75 : vector<16x128xf32>
    %c0_24 = arith.constant 0 : index
    %c0_25 = arith.constant 0 : index
    %77 = vector.load %arg6[%c0_24, %c0_25] : memref<16x128xf32, #tpu.memory_space<vmem>>, vector<16x128xf32>
    tpu.vector_store %arg6[%c0_24, %c0_25], %76 {strides = array<i32>} : memref<16x128xf32, #tpu.memory_space<vmem>>, vector<16x128xf32>,
    return
  }
  func.func @transform_0(%arg0: i32) -> (i32, i32) {
    %c0_i32 = arith.constant 0 : i32
    %c0_i32_0 = arith.constant 0 : i32
    return %arg0, %c0_i32 : i32, i32
  }
  func.func @transform_1(%arg0: i32) -> (i32, i32) {
    %c0_i32 = arith.constant 0 : i32
    %c0_i32_0 = arith.constant 0 : i32
    return %arg0, %c0_i32 : i32, i32
  }
  func.func @transform_2(%arg0: i32) -> (i32, i32) {
    %c0_i32 = arith.constant 0 : i32
    %c0_i32_0 = arith.constant 0 : i32
    return %arg0, %c0_i32 : i32, i32
  }
  func.func @transform_3(%arg0: i32) -> (i32, i32, i32) {
    %c0_i32 = arith.constant 0 : i32
    %c0_i32_0 = arith.constant 0 : i32
    %c0_i32_1 = arith.constant 0 : i32
    %c0_i32_2 = arith.constant 0 : i32
    return %c0_i32, %c0_i32_0, %c0_i32_1 : i32, i32, i32
  }
  func.func @transform_4(%arg0: i32) -> (i32, i32) {
    %c0_i32 = arith.constant 0 : i32
    %c0_i32_0 = arith.constant 0 : i32
    %c0_i32_1 = arith.constant 0 : i32
    return %c0_i32, %c0_i32_0 : i32, i32
  }
  func.func @transform_5(%arg0: i32) -> (i32, i32) {
    %c0_i32 = arith.constant 0 : i32
    %c0_i32_0 = arith.constant 0 : i32
    return %arg0, %c0_i32 : i32, i32
  }
}

</mosaic_0001>

<llo_original>
// kernel: multi_head_attention.1
$region0: #{multi_head_attention.1}
  #allocation0 [shape = 'u32[]', space=smem, size = 0x4, offset = 0x4, fixed_abs, tag = 'smem constant byte address 0x4 - core index']
  #allocation1 [shape = 'u32[144,128]{1,0:T(1,128)}', space=vmem, size = 0x12000, scoped, tag = 'internal scratch']
  %s0 = inlined_call_operand.hbm [shape: f32[32,128], index: 0, kind: input, shape index: {}]
  %s1 = inlined_call_operand.hbm [shape: f32[32,128], index: 1, kind: input, shape index: {}]
  %s2 = inlined_call_operand.hbm [shape: f32[32,128], index: 2, kind: input, shape index: {}]
  %s3 = inlined_call_operand.hbm [shape: f32[4,128,128], index: 3, kind: input, shape index: {}]
  %s4 = inlined_call_operand.vmem [shape: f32[4,128], index: 4, kind: input, shape index: {}]
  %s5 = inlined_call_operand.hbm [shape: f32[32,128], index: 5, kind: output, shape index: {}]
  %s6 = sld [smem:[#allocation0]]
  $region69: #{multi_head_attention.1} parent=0
    _
  %s8 = ssub.s32 1, %s6
  %s9 = scalar_select 0, %s8, %s6
  $region1: #{multi_head_attention.1} parent=0
    #allocation2 [shape = 'u8[16384]{0}', space=vmem, size = 0x4000, scoped, tag = 'input window, operand 0']
    #allocation3 [shape = 's32[2]{0}', space=sflag, size = 0x8, scoped, tag = 'scoped memory for multi_head_attention.1']
    #allocation4 [shape = 's32[2]{0}', space=sflag, size = 0x8, scoped, tag = 'scoped memory for multi_head_attention.1']
    #allocation5 [shape = 'u8[16384]{0}', space=vmem, size = 0x4000, scoped, tag = 'input window, operand 1']
    #allocation6 [shape = 's32[2]{0}', space=sflag, size = 0x8, scoped, tag = 'scoped memory for multi_head_attention.1']
    #allocation7 [shape = 'u8[16384]{0}', space=vmem, size = 0x4000, scoped, tag = 'input window, operand 2']
    #allocation8 [shape = 'u8[262144]{0}', space=vmem, size = 0x40000, scoped, tag = 'input window, operand 3, single buffered']
    #allocation9 [shape = 's32[1]{0}', space=sflag, size = 0x4, scoped, tag = 'scoped memory for multi_head_attention.1']
    #allocation10 [shape = 'u8[16384]{0}', space=vmem, size = 0x4000, scoped, tag = 'output window, operand 0']
    %10 = vsyncpa [#allocation3], 0
    %s11 = scalar_lea.sflag [#allocation3], 1
    %12 = vsyncpa %s11, 0
    %13 = vsyncpa [#allocation6], 0
    %s14 = scalar_lea.sflag [#allocation6], 1
    %15 = vsyncpa %s14, 0
    %16 = vsyncpa [#allocation9], 0
    %17 = vsyncpa [#allocation4], 0
    %s18 = scalar_lea.sflag [#allocation4], 1
    %19 = vsyncpa %s18, 0
    loop: start=0, step=1, limit=4
    $region2: #{multi_head_attention.1} parent=1 // loop_pre_header
      _
    $region3: #{multi_head_attention.1} parent=1 // loop_header
      %s21 = sphi 0, %s25
      %p22 = scmp.ge.s32.totalorder %s21, 4
      %s31 = sphi 0, %s33
      %s34 = sphi 0, %s31
      %s35 = sphi 0, %s34
      %s51 = sphi 0, %s35
      %s57 = sphi 0, %s59
      %s60 = sphi 0, %s57
      %s61 = sphi 0, %s60
      %s77 = sphi 0, %s61
      %s83 = sphi 0, %s85
      %s86 = sphi 0, %s83
      %s87 = sphi 0, %s86
      %s103 = sphi 0, %s87
      %s107 = sphi 0, %s107
      %s109 = sphi 0, %s107
      %s110 = sphi 0, %s109
      %s124 = sphi 0, %s110
      %s128 = sphi 0, %s128
      %s130 = sphi 0, %s128
      %s131 = sphi 0, %s130
      %s145 = sphi 0, %s131
      %s151 = sphi 0, %s153
      %s154 = sphi 0, %s151
      %s155 = sphi 0, %s154
      %s171 = sphi 0, %s155
    $region4: #{multi_head_attention.1} parent=1 // loop_header_branch
      %24 = sbr.rel (%p22) target = $region8
    $region5: #{multi_head_attention.1} parent=1 // loop_body
      %s26 = ssub.s32 %s21, 1
      %s27 = ssub.s32 %s21, 2
      %s28 = sadd.s32 %s21, 1
      %s29 = ssub.s32 %s21, %s28
      %p30 = scmp.eq.s32.totalorder %s29, 0
      %s32 = sadd.s32 %s31, 1
      %s33 = scalar_select %p30, %s31, %s32
      %p36 = pneg %p30
      %p37 = scmp.eq.s32.totalorder %s21, 1
      %p38 = por %p36, %p37
      %p39 = scmp.ne.s32.totalorder %s31, %s34
      %p40 = scmp.eq.s32.totalorder %s21, 0
      %p41 = por %p39, %p40
      %p42 = scmp.ne.s32.totalorder %s31, %s34
      %p43 = scmp.eq.s32.totalorder %s26, 1
      %p44 = por %p42, %p43
      %p45 = scmp.ne.s32.totalorder %s34, %s35
      %p46 = scmp.eq.s32.totalorder %s26, 0
      %p47 = por %p45, %p46
      %p48 = scmp.ne.s32.totalorder %s34, %s35
      %p49 = scmp.eq.s32.totalorder %s27, 1
      %p50 = por %p48, %p49
      %p52 = scmp.ne.s32.totalorder %s35, %s51
      %p53 = scmp.eq.s32.totalorder %s27, 0
      %p54 = por %p52, %p53
      %s55 = ssub.s32 %s21, %s28
      %p56 = scmp.eq.s32.totalorder %s55, 0
      %s58 = sadd.s32 %s57, 1
      %s59 = scalar_select %p56, %s57, %s58
      %p62 = pneg %p56
      %p63 = scmp.eq.s32.totalorder %s21, 1
      %p64 = por %p62, %p63
      %p65 = scmp.ne.s32.totalorder %s57, %s60
      %p66 = scmp.eq.s32.totalorder %s21, 0
      %p67 = por %p65, %p66
      %p68 = scmp.ne.s32.totalorder %s57, %s60
      %p69 = scmp.eq.s32.totalorder %s26, 1
      %p70 = por %p68, %p69
      %p71 = scmp.ne.s32.totalorder %s60, %s61
      %p72 = scmp.eq.s32.totalorder %s26, 0
      %p73 = por %p71, %p72
      %p74 = scmp.ne.s32.totalorder %s60, %s61
      %p75 = scmp.eq.s32.totalorder %s27, 1
      %p76 = por %p74, %p75
      %p78 = scmp.ne.s32.totalorder %s61, %s77
      %p79 = scmp.eq.s32.totalorder %s27, 0
      %p80 = por %p78, %p79
      %s81 = ssub.s32 %s21, %s28
      %p82 = scmp.eq.s32.totalorder %s81, 0
      %s84 = sadd.s32 %s83, 1
      %s85 = scalar_select %p82, %s83, %s84
      %p88 = pneg %p82
      %p89 = scmp.eq.s32.totalorder %s21, 1
      %p90 = por %p88, %p89
      %p91 = scmp.ne.s32.totalorder %s83, %s86
      %p92 = scmp.eq.s32.totalorder %s21, 0
      %p93 = por %p91, %p92
      %p94 = scmp.ne.s32.totalorder %s83, %s86
      %p95 = scmp.eq.s32.totalorder %s26, 1
      %p96 = por %p94, %p95
      %p97 = scmp.ne.s32.totalorder %s86, %s87
      %p98 = scmp.eq.s32.totalorder %s26, 0
      %p99 = por %p97, %p98
      %p100 = scmp.ne.s32.totalorder %s86, %s87
      %p101 = scmp.eq.s32.totalorder %s27, 1
      %p102 = por %p100, %p101
      %p104 = scmp.ne.s32.totalorder %s87, %s103
      %p105 = scmp.eq.s32.totalorder %s27, 0
      %p106 = por %p104, %p105
      %s108 = sadd.s32 %s107, 1
      %p111 = scmp.eq.s32.totalorder %s21, 1
      %p112 = scmp.ne.s32.totalorder %s107, %s109
      %p113 = scmp.eq.s32.totalorder %s21, 0
      %p114 = por %p112, %p113
      %p115 = scmp.ne.s32.totalorder %s107, %s109
      %p116 = scmp.eq.s32.totalorder %s26, 1
      %p117 = por %p115, %p116
      %p118 = scmp.ne.s32.totalorder %s109, %s110
      %p119 = scmp.eq.s32.totalorder %s26, 0
      %p120 = por %p118, %p119
      %p121 = scmp.ne.s32.totalorder %s109, %s110
      %p122 = scmp.eq.s32.totalorder %s27, 1
      %p123 = por %p121, %p122
      %p125 = scmp.ne.s32.totalorder %s110, %s124
      %p126 = scmp.eq.s32.totalorder %s27, 0
      %p127 = por %p125, %p126
      %s129 = sadd.s32 %s128, 1
      %p132 = scmp.eq.s32.totalorder %s21, 1
      %p133 = scmp.ne.s32.totalorder %s128, %s130
      %p134 = scmp.eq.s32.totalorder %s21, 0
      %p135 = por %p133, %p134
      %p136 = scmp.ne.s32.totalorder %s128, %s130
      %p137 = scmp.eq.s32.totalorder %s26, 1
      %p138 = por %p136, %p137
      %p139 = scmp.ne.s32.totalorder %s130, %s131
      %p140 = scmp.eq.s32.totalorder %s26, 0
      %p141 = por %p139, %p140
      %p142 = scmp.ne.s32.totalorder %s130, %s131
      %p143 = scmp.eq.s32.totalorder %s27, 1
      %p144 = por %p142, %p143
      %p146 = scmp.ne.s32.totalorder %s131, %s145
      %p147 = scmp.eq.s32.totalorder %s27, 0
      %p148 = por %p146, %p147
      %s149 = ssub.s32 %s21, %s28
      %p150 = scmp.eq.s32.totalorder %s149, 0
      %s152 = sadd.s32 %s151, 1
      %s153 = scalar_select %p150, %s151, %s152
      %p156 = pneg %p150
      %p157 = scmp.eq.s32.totalorder %s21, 1
      %p158 = por %p156, %p157
      %p159 = scmp.ne.s32.totalorder %s151, %s154
      %p160 = scmp.eq.s32.totalorder %s21, 0
      %p161 = por %p159, %p160
      %p162 = scmp.ne.s32.totalorder %s151, %s154
      %p163 = scmp.eq.s32.totalorder %s26, 1
      %p164 = por %p162, %p163
      %p165 = scmp.ne.s32.totalorder %s154, %s155
      %p166 = scmp.eq.s32.totalorder %s26, 0
      %p167 = por %p165, %p166
      %p168 = scmp.ne.s32.totalorder %s154, %s155
      %p169 = scmp.eq.s32.totalorder %s27, 1
      %p170 = por %p168, %p169
      %p172 = scmp.ne.s32.totalorder %s155, %s171
      %p173 = scmp.eq.s32.totalorder %s27, 0
      %p174 = por %p172, %p173
      %p175 = scmp.le.s32.totalorder 1, %s21
      %p176 = scmp.lt.s32.totalorder %s21, 3
      %p177 = pnand %p175, %p176
      %p178 = pneg %p177
      // Predicated region
      $region9: #{multi_head_attention.1} parent=5 // pred_check
        _
      $region10: #{multi_head_attention.1} parent=5 // pred_check_branch
        %180 = sbr.rel (%p177) target = $region12
      $region11: #{multi_head_attention.1} parent=5 // pred_region
        %s181 = ssub.s32 %s21, 1
        // Predicated region
        $region13: #{multi_head_attention.1} parent=11 // pred_check
          %p182 = pneg %p120
        $region14: #{multi_head_attention.1} parent=11 // pred_check_branch
          %184 = sbr.rel (%p182) target = $region16
        $region15: #{multi_head_attention.1} parent=11 // pred_region
          %s186 = ssub.s32 8192, 8192
          %187 = vsyncadd [#allocation9], %s186
          %s188 = sshll.u32 [#allocation8], 4
          %s189 = int_to_ptr.vmem [resolvable:$true] %s188
          %194 = dma.hbm_to_vmem [thread:$0]  %s3, 8192, %s189, [#allocation9], 128, 128, 8
        $region16: #{multi_head_attention.1} parent=11 // pred_fallthru
          _
        // Predicated region
        $region17: #{multi_head_attention.1} parent=11 // pred_check
          %p195 = pneg %p141
        $region18: #{multi_head_attention.1} parent=11 // pred_check_branch
          %197 = sbr.rel (%p195) target = $region20
        $region19: #{multi_head_attention.1} parent=11 // pred_region
          _
        $region20: #{multi_head_attention.1} parent=11 // pred_fallthru
          _
      $region12: #{multi_head_attention.1} parent=5 // pred_fallthru
        _
      %p198 = scmp.lt.s32.totalorder %s21, 2
      // Predicated region
      $region21: #{multi_head_attention.1} parent=5 // pred_check
        %p199 = pneg %p198
      $region22: #{multi_head_attention.1} parent=5 // pred_check_branch
        %201 = sbr.rel (%p199) target = $region24
      $region23: #{multi_head_attention.1} parent=5 // pred_region
        // Predicated region
        $region25: #{multi_head_attention.1} parent=23 // pred_check
          %p202 = pneg %p41
        $region26: #{multi_head_attention.1} parent=23 // pred_check_branch
          %204 = sbr.rel (%p202) target = $region28
        $region27: #{multi_head_attention.1} parent=23 // pred_region
          %s205 = sand.u32 %s31, 1
          %s206 = scalar_lea.sflag [#allocation3], %s205
          %s207 = sand.u32 %s31, 1
          %s208 = smul.addr %s207, 16
          %s209 = scalar_lea.vmem [#allocation2], %s208
          %s210 = smul.u32 2, %s21
          %s212 = ssub.s32 256, 256
          %213 = vsyncadd %s206, %s212
          %s214 = smul.addr %s210, 128
          %s215 = scalar_lea.hbm %s0, %s214
          %s216 = sshll.u32 %s209, 4
          %s217 = int_to_ptr.vmem [resolvable:$true] %s216
          %222 = dma.hbm_to_vmem [thread:$0]  %s215, 256, %s217, %s206, 128, 128, 8
        $region28: #{multi_head_attention.1} parent=23 // pred_fallthru
          _
        // Predicated region
        $region29: #{multi_head_attention.1} parent=23 // pred_check
          %p223 = pneg %p67
        $region30: #{multi_head_attention.1} parent=23 // pred_check_branch
          %225 = sbr.rel (%p223) target = $region32
        $region31: #{multi_head_attention.1} parent=23 // pred_region
          %s226 = sand.u32 %s21, 1
          %s227 = scalar_lea.sflag [#allocation6], %s226
          %s228 = sand.u32 %s57, 1
          %s229 = smul.addr %s228, 16
          %s230 = scalar_lea.vmem [#allocation5], %s229
          %s231 = smul.u32 2, %s21
          %s233 = ssub.s32 256, 256
          %234 = vsyncadd %s227, %s233
          %s235 = smul.addr %s231, 128
          %s236 = scalar_lea.hbm %s1, %s235
          %s237 = sshll.u32 %s230, 4
          %s238 = int_to_ptr.vmem [resolvable:$true] %s237
          %243 = dma.hbm_to_vmem [thread:$0]  %s236, 256, %s238, %s227, 128, 128, 8
        $region32: #{multi_head_attention.1} parent=23 // pred_fallthru
          _
        // Predicated region
        $region33: #{multi_head_attention.1} parent=23 // pred_check
          %p244 = pneg %p93
        $region34: #{multi_head_attention.1} parent=23 // pred_check_branch
          %246 = sbr.rel (%p244) target = $region36
        $region35: #{multi_head_attention.1} parent=23 // pred_region
          %s247 = sand.u32 %s21, 1
          %s248 = scalar_lea.sflag [#allocation6], %s247
          %s249 = sand.u32 %s83, 1
          %s250 = smul.addr %s249, 16
          %s251 = scalar_lea.vmem [#allocation7], %s250
          %s252 = smul.u32 2, %s21
          %s254 = ssub.s32 256, 256
          %255 = vsyncadd %s248, %s254
          %s256 = smul.addr %s252, 128
          %s257 = scalar_lea.hbm %s2, %s256
          %s258 = sshll.u32 %s251, 4
          %s259 = int_to_ptr.vmem [resolvable:$true] %s258
          %264 = dma.hbm_to_vmem [thread:$0]  %s257, 256, %s259, %s248, 128, 128, 8
        $region36: #{multi_head_attention.1} parent=23 // pred_fallthru
          _
      $region24: #{multi_head_attention.1} parent=5 // pred_fallthru
        _
      %p265 = scmp.le.s32.totalorder 1, %s21
      %p266 = scmp.lt.s32.totalorder %s21, 3
      %p267 = pnand %p265, %p266
      %p268 = pneg %p267
      // Predicated region
      $region37: #{multi_head_attention.1} parent=5 // pred_check
        _
      $region38: #{multi_head_attention.1} parent=5 // pred_check_branch
        %270 = sbr.rel (%p267) target = $region40
      $region39: #{multi_head_attention.1} parent=5 // pred_region
        %s271 = ssub.s32 %s21, 1
        %s272 = sand.u32 %s34, 1
        %s273 = scalar_lea.sflag [#allocation3], %s272
        %s274 = sand.u32 %s34, 1
        %s275 = smul.addr %s274, 16
        %s276 = scalar_lea.vmem [#allocation2], %s275
        // Predicated region
        $region41: #{multi_head_attention.1} parent=39 // pred_check
          %p277 = pneg %p47
        $region42: #{multi_head_attention.1} parent=39 // pred_check_branch
          %279 = sbr.rel (%p277) target = $region44
        $region43: #{multi_head_attention.1} parent=39 // pred_region
          %280 = dma.done %s273, 256
        $region44: #{multi_head_attention.1} parent=39 // pred_fallthru
          _
        %s281 = sand.u32 %s26, 1
        %s282 = scalar_lea.sflag [#allocation6], %s281
        %s283 = sand.u32 %s60, 1
        %s284 = smul.addr %s283, 16
        %s285 = scalar_lea.vmem [#allocation5], %s284
        // Predicated region
        $region45: #{multi_head_attention.1} parent=39 // pred_check
          %p286 = pneg %p73
        $region46: #{multi_head_attention.1} parent=39 // pred_check_branch
          %288 = sbr.rel (%p286) target = $region48
        $region47: #{multi_head_attention.1} parent=39 // pred_region
          %289 = dma.done %s282, 256
        $region48: #{multi_head_attention.1} parent=39 // pred_fallthru
          _
        %s290 = sand.u32 %s26, 1
        %s291 = scalar_lea.sflag [#allocation6], %s290
        %s292 = sand.u32 %s86, 1
        %s293 = smul.addr %s292, 16
        %s294 = scalar_lea.vmem [#allocation7], %s293
        // Predicated region
        $region49: #{multi_head_attention.1} parent=39 // pred_check
          %p295 = pneg %p99
        $region50: #{multi_head_attention.1} parent=39 // pred_check_branch
          %297 = sbr.rel (%p295) target = $region52
        $region51: #{multi_head_attention.1} parent=39 // pred_region
          %298 = dma.done %s291, 256
        $region52: #{multi_head_attention.1} parent=39 // pred_fallthru
          _
        // Predicated region
        $region53: #{multi_head_attention.1} parent=39 // pred_check
          %p299 = pneg %p120
        $region54: #{multi_head_attention.1} parent=39 // pred_check_branch
          %301 = sbr.rel (%p299) target = $region56
        $region55: #{multi_head_attention.1} parent=39 // pred_region
          %302 = dma.done [#allocation9], 8192
        $region56: #{multi_head_attention.1} parent=39 // pred_fallthru
          _
        %s303 = sand.u32 %s34, 1
        %s304 = scalar_lea.sflag [#allocation3], %s303
        %s305 = sand.u32 %s34, 1
        %s306 = smul.addr %s305, 16
        %s307 = scalar_lea.vmem [#allocation2], %s306
        %p308 = pneg %p47
        %p309 = pneg %p44
        %s310 = sand.u32 %s26, 1
        %s311 = scalar_lea.sflag [#allocation6], %s310
        %s312 = sand.u32 %s60, 1
        %s313 = smul.addr %s312, 16
        %s314 = scalar_lea.vmem [#allocation5], %s313
        %p315 = pneg %p73
        %p316 = pneg %p70
        %s317 = sand.u32 %s26, 1
        %s318 = scalar_lea.sflag [#allocation6], %s317
        %s319 = sand.u32 %s86, 1
        %s320 = smul.addr %s319, 16
        %s321 = scalar_lea.vmem [#allocation7], %s320
        %p322 = pneg %p99
        %p323 = pneg %p96
        %p324 = pneg %p120
        %p325 = pneg %p117
        %p326 = pneg %p141
        %p327 = pneg %p138
        %p328 = pneg %p167
        %p329 = pneg %p164
        %s330 = sand.u32 %s154, 1
        %s331 = scalar_lea.sflag [#allocation4], %s330
        %s332 = sand.u32 %s154, 1
        %s333 = smul.addr %s332, 16
        %s334 = scalar_lea.vmem [#allocation10], %s333
        %s335 = smul.u32 2, %s26
        %s336 = smul.u32 2, %s26
        %s337 = smul.u32 2, %s26
        %s338 = smul.u32 2, %s26
        %v339 = vld [vmem:[%s4] sm:$0xf]
        %v340 = vld [vmem:[#allocation8] sm:$0xff]
        %v341 = vld [vmem:[#allocation8 + $0x8] sm:$0xff]
        %v342 = vld [vmem:[#allocation8 + $0x10] sm:$0xff]
        %v343 = vld [vmem:[#allocation8 + $0x18] sm:$0xff]
        %v344 = vld [vmem:[#allocation8 + $0x20] sm:$0xff]
        %v345 = vld [vmem:[#allocation8 + $0x28] sm:$0xff]
        %v346 = vld [vmem:[#allocation8 + $0x30] sm:$0xff]
        %v347 = vld [vmem:[#allocation8 + $0x38] sm:$0xff]
        %v348 = vld [vmem:[#allocation8 + $0x40] sm:$0xff]
        %v349 = vld [vmem:[#allocation8 + $0x48] sm:$0xff]
        %v350 = vld [vmem:[#allocation8 + $0x50] sm:$0xff]
        %v351 = vld [vmem:[#allocation8 + $0x58] sm:$0xff]
        %v352 = vld [vmem:[#allocation8 + $0x60] sm:$0xff]
        %v353 = vld [vmem:[#allocation8 + $0x68] sm:$0xff]
        %v354 = vld [vmem:[#allocation8 + $0x70] sm:$0xff]
        %v355 = vld [vmem:[#allocation8 + $0x78] sm:$0xff]
        %s356 = scalar_lea.vmem [#allocation8], 128
        %v357 = vld [vmem:[%s356] sm:$0xff]
        %v358 = vld [vmem:[%s356 + $0x8] sm:$0xff]
        %v359 = vld [vmem:[%s356 + $0x10] sm:$0xff]
        %v360 = vld [vmem:[%s356 + $0x18] sm:$0xff]
        %v361 = vld [vmem:[%s356 + $0x20] sm:$0xff]
        %v362 = vld [vmem:[%s356 + $0x28] sm:$0xff]
        %v363 = vld [vmem:[%s356 + $0x30] sm:$0xff]
        %v364 = vld [vmem:[%s356 + $0x38] sm:$0xff]
        %v365 = vld [vmem:[%s356 + $0x40] sm:$0xff]
        %v366 = vld [vmem:[%s356 + $0x48] sm:$0xff]
        %v367 = vld [vmem:[%s356 + $0x50] sm:$0xff]
        %v368 = vld [vmem:[%s356 + $0x58] sm:$0xff]
        %v369 = vld [vmem:[%s356 + $0x60] sm:$0xff]
        %v370 = vld [vmem:[%s356 + $0x68] sm:$0xff]
        %v371 = vld [vmem:[%s356 + $0x70] sm:$0xff]
        %v372 = vld [vmem:[%s356 + $0x78] sm:$0xff]
        %s373 = scalar_lea.vmem [#allocation8], 256
        %v374 = vld [vmem:[%s373] sm:$0xff]
        %v375 = vld [vmem:[%s373 + $0x8] sm:$0xff]
        %v376 = vld [vmem:[%s373 + $0x10] sm:$0xff]
        %v377 = vld [vmem:[%s373 + $0x18] sm:$0xff]
        %v378 = vld [vmem:[%s373 + $0x20] sm:$0xff]
        %v379 = vld [vmem:[%s373 + $0x28] sm:$0xff]
        %v380 = vld [vmem:[%s373 + $0x30] sm:$0xff]
        %v381 = vld [vmem:[%s373 + $0x38] sm:$0xff]
        %v382 = vld [vmem:[%s373 + $0x40] sm:$0xff]
        %v383 = vld [vmem:[%s373 + $0x48] sm:$0xff]
        %v384 = vld [vmem:[%s373 + $0x50] sm:$0xff]
        %v385 = vld [vmem:[%s373 + $0x58] sm:$0xff]
        %v386 = vld [vmem:[%s373 + $0x60] sm:$0xff]
        %v387 = vld [vmem:[%s373 + $0x68] sm:$0xff]
        %v388 = vld [vmem:[%s373 + $0x70] sm:$0xff]
        %v389 = vld [vmem:[%s373 + $0x78] sm:$0xff]
        %s390 = scalar_lea.vmem [#allocation8], 384
        %v391 = vld [vmem:[%s390] sm:$0xff]
        %v392 = vld [vmem:[%s390 + $0x8] sm:$0xff]
        %v393 = vld [vmem:[%s390 + $0x10] sm:$0xff]
        %v394 = vld [vmem:[%s390 + $0x18] sm:$0xff]
        %v395 = vld [vmem:[%s390 + $0x20] sm:$0xff]
        %v396 = vld [vmem:[%s390 + $0x28] sm:$0xff]
        %v397 = vld [vmem:[%s390 + $0x30] sm:$0xff]
        %v398 = vld [vmem:[%s390 + $0x38] sm:$0xff]
        %v399 = vld [vmem:[%s390 + $0x40] sm:$0xff]
        %v400 = vld [vmem:[%s390 + $0x48] sm:$0xff]
        %v401 = vld [vmem:[%s390 + $0x50] sm:$0xff]
        %v402 = vld [vmem:[%s390 + $0x58] sm:$0xff]
        %v403 = vld [vmem:[%s390 + $0x60] sm:$0xff]
        %v404 = vld [vmem:[%s390 + $0x68] sm:$0xff]
        %v405 = vld [vmem:[%s390 + $0x70] sm:$0xff]
        %v406 = vld [vmem:[%s390 + $0x78] sm:$0xff]
        %v407 = vld [vmem:[%s276] sm:$0xff]
        %v408 = vld [vmem:[%s276 + $0x8] sm:$0xff]
        %v409 = vlaneseq
        %v410 = vshrl.u32 %v409, 7
        %v411 = vsub.s32 0, %v410
        %v412 = vrot.slane %v339, %v411
        %413 = vmatprep.subr.mxu0 0.0
        %414 = vmatpush1.msra.mxu0 %v340
        %415 = vmatprep.subr.mxu0 0.0
        %416 = vmatpush1.msra.mxu0 %v341
        %417 = vmatprep.subr.mxu0 0.0
        %418 = vmatpush1.msra.mxu0 %v342
        %419 = vmatprep.subr.mxu0 0.0
        %420 = vmatpush1.msra.mxu0 %v343
        %421 = vmatprep.subr.mxu0 0.0
        %422 = vmatpush1.msra.mxu0 %v344
        %423 = vmatprep.subr.mxu0 0.0
        %424 = vmatpush1.msra.mxu0 %v345
        %425 = vmatprep.subr.mxu0 0.0
        %426 = vmatpush1.msra.mxu0 %v346
        %427 = vmatprep.subr.mxu0 0.0
        %428 = vmatpush1.msra.mxu0 %v347
        %429 = vmatprep.subr.mxu0 0.0
        %430 = vmatpush1.msra.mxu0 %v348
        %431 = vmatprep.subr.mxu0 0.0
        %432 = vmatpush1.msra.mxu0 %v349
        %433 = vmatprep.subr.mxu0 0.0
        %434 = vmatpush1.msra.mxu0 %v350
        %435 = vmatprep.subr.mxu0 0.0
        %436 = vmatpush1.msra.mxu0 %v351
        %437 = vmatprep.subr.mxu0 0.0
        %438 = vmatpush1.msra.mxu0 %v352
        %439 = vmatprep.subr.mxu0 0.0
        %440 = vmatpush1.msra.mxu0 %v353
        %441 = vmatprep.subr.mxu0 0.0
        %442 = vmatpush1.msra.mxu0 %v354
        %443 = vmatprep.subr.mxu0 0.0
        %444 = vmatpush1.msra.mxu0 %v355
        %445 = vmatprep.subr.mxu0 0.0
        %446 = vmatpush1.msra.mxu0 0.0
        %447 = vmatprep.subr.mxu0 0.0
        %448 = vmatpush1.msra.mxu0 0.0
        %449 = vmatprep.subr.mxu0 0.0
        %450 = vmatpush1.msra.mxu0 0.0
        %451 = vmatprep.subr.mxu0 0.0
        %452 = vmatpush1.msra.mxu0 0.0
        %453 = vmatprep.subr.mxu0 0.0
        %454 = vmatpush1.msra.mxu0 0.0
        %455 = vmatprep.subr.mxu0 0.0
        %456 = vmatpush1.msra.mxu0 0.0
        %457 = vmatprep.subr.mxu0 0.0
        %458 = vmatpush1.msra.mxu0 0.0
        %459 = vmatprep.subr.mxu0 0.0
        %460 = vmatpush1.msra.mxu0 0.0
        %461 = vmatprep.subr.mxu0 0.0
        %462 = vmatpush1.msra.mxu0 0.0
        %463 = vmatprep.subr.mxu0 0.0
        %464 = vmatpush1.msra.mxu0 0.0
        %465 = vmatprep.subr.mxu0 0.0
        %466 = vmatpush1.msra.mxu0 0.0
        %467 = vmatprep.subr.mxu0 0.0
        %468 = vmatpush1.msra.mxu0 0.0
        %469 = vmatprep.subr.mxu0 0.0
        %470 = vmatpush1.msra.mxu0 0.0
        %471 = vmatprep.subr.mxu0 0.0
        %472 = vmatpush1.msra.mxu0 0.0
        %473 = vmatprep.subr.mxu0 0.0
        %474 = vmatpush1.msra.mxu0 0.0
        %475 = vmatprep.subr.mxu0 0.0
        %476 = vmatpush1.msra.mxu0 0.0
        %477 = vmatprep.mubr.f32.mxu0 0.0
        %478 = vmatmul.mubr.f32.gmra.mrb[0].mxu0 %v407
        %v479 = vpop.f32.mrb[0].mxu0
        %v480 = vadd.f32 %v412, %v479
        %v481 = vpop.f32.mrb[0].mxu0
        %482 = vmatprep.mubr.f32.mxu0 0.0
        %483 = vmatmul.mubr.f32.gmra.mrb[0].mxu0 %v408
        %v484 = vpop.f32.mrb[0].mxu0
        %v485 = vadd.f32 %v412, %v484
        %v486 = vpop.f32.mrb[0].mxu0
        %487 = vdwg.mxu0
        %v488 = vld [vmem:[%s285] sm:$0xff]
        %v489 = vld [vmem:[%s285 + $0x8] sm:$0xff]
        %v490 = vlaneseq
        %v491 = vshrl.u32 %v490, 7
        %v492 = vsub.s32 1, %v491
        %v493 = vrot.slane %v339, %v492
        %494 = vmatprep.subr.mxu0 0.0
        %495 = vmatpush1.msra.mxu0 %v357
        %496 = vmatprep.subr.mxu0 0.0
        %497 = vmatpush1.msra.mxu0 %v358
        %498 = vmatprep.subr.mxu0 0.0
        %499 = vmatpush1.msra.mxu0 %v359
        %500 = vmatprep.subr.mxu0 0.0
        %501 = vmatpush1.msra.mxu0 %v360
        %502 = vmatprep.subr.mxu0 0.0
        %503 = vmatpush1.msra.mxu0 %v361
        %504 = vmatprep.subr.mxu0 0.0
        %505 = vmatpush1.msra.mxu0 %v362
        %506 = vmatprep.subr.mxu0 0.0
        %507 = vmatpush1.msra.mxu0 %v363
        %508 = vmatprep.subr.mxu0 0.0
        %509 = vmatpush1.msra.mxu0 %v364
        %510 = vmatprep.subr.mxu0 0.0
        %511 = vmatpush1.msra.mxu0 %v365
        %512 = vmatprep.subr.mxu0 0.0
        %513 = vmatpush1.msra.mxu0 %v366
        %514 = vmatprep.subr.mxu0 0.0
        %515 = vmatpush1.msra.mxu0 %v367
        %516 = vmatprep.subr.mxu0 0.0
        %517 = vmatpush1.msra.mxu0 %v368
        %518 = vmatprep.subr.mxu0 0.0
        %519 = vmatpush1.msra.mxu0 %v369
        %520 = vmatprep.subr.mxu0 0.0
        %521 = vmatpush1.msra.mxu0 %v370
        %522 = vmatprep.subr.mxu0 0.0
        %523 = vmatpush1.msra.mxu0 %v371
        %524 = vmatprep.subr.mxu0 0.0
        %525 = vmatpush1.msra.mxu0 %v372
        %526 = vmatprep.subr.mxu0 0.0
        %527 = vmatpush1.msra.mxu0 0.0
        %528 = vmatprep.subr.mxu0 0.0
        %529 = vmatpush1.msra.mxu0 0.0
        %530 = vmatprep.subr.mxu0 0.0
        %531 = vmatpush1.msra.mxu0 0.0
        %532 = vmatprep.subr.mxu0 0.0
        %533 = vmatpush1.msra.mxu0 0.0
        %534 = vmatprep.subr.mxu0 0.0
        %535 = vmatpush1.msra.mxu0 0.0
        %536 = vmatprep.subr.mxu0 0.0
        %537 = vmatpush1.msra.mxu0 0.0
        %538 = vmatprep.subr.mxu0 0.0
        %539 = vmatpush1.msra.mxu0 0.0
        %540 = vmatprep.subr.mxu0 0.0
        %541 = vmatpush1.msra.mxu0 0.0
        %542 = vmatprep.subr.mxu0 0.0
        %543 = vmatpush1.msra.mxu0 0.0
        %544 = vmatprep.subr.mxu0 0.0
        %545 = vmatpush1.msra.mxu0 0.0
        %546 = vmatprep.subr.mxu0 0.0
        %547 = vmatpush1.msra.mxu0 0.0
        %548 = vmatprep.subr.mxu0 0.0
        %549 = vmatpush1.msra.mxu0 0.0
        %550 = vmatprep.subr.mxu0 0.0
        %551 = vmatpush1.msra.mxu0 0.0
        %552 = vmatprep.subr.mxu0 0.0
        %553 = vmatpush1.msra.mxu0 0.0
        %554 = vmatprep.subr.mxu0 0.0
        %555 = vmatpush1.msra.mxu0 0.0
        %556 = vmatprep.subr.mxu0 0.0
        %557 = vmatpush1.msra.mxu0 0.0
        %558 = vmatprep.mubr.f32.mxu0 0.0
        %559 = vmatmul.mubr.f32.gmra.mrb[0].mxu0 %v488
        %v560 = vpop.f32.mrb[0].mxu0
        %v561 = vadd.f32 %v493, %v560
        %v562 = vpop.f32.mrb[0].mxu0
        %563 = vmatprep.mubr.f32.mxu0 0.0
        %564 = vmatmul.mubr.f32.gmra.mrb[0].mxu0 %v489
        %v565 = vpop.f32.mrb[0].mxu0
        %v566 = vadd.f32 %v493, %v565
        %v567 = vpop.f32.mrb[0].mxu0
        %568 = vdwg.mxu0
        %v569 = vld [vmem:[%s294] sm:$0xff]
        %v570 = vld [vmem:[%s294 + $0x8] sm:$0xff]
        %v571 = vlaneseq
        %v572 = vshrl.u32 %v571, 7
        %v573 = vsub.s32 2, %v572
        %v574 = vrot.slane %v339, %v573
        %575 = vmatprep.subr.mxu0 0.0
        %576 = vmatpush1.msra.mxu0 %v374
        %577 = vmatprep.subr.mxu0 0.0
        %578 = vmatpush1.msra.mxu0 %v375
        %579 = vmatprep.subr.mxu0 0.0
        %580 = vmatpush1.msra.mxu0 %v376
        %581 = vmatprep.subr.mxu0 0.0
        %582 = vmatpush1.msra.mxu0 %v377
        %583 = vmatprep.subr.mxu0 0.0
        %584 = vmatpush1.msra.mxu0 %v378
        %585 = vmatprep.subr.mxu0 0.0
        %586 = vmatpush1.msra.mxu0 %v379
        %587 = vmatprep.subr.mxu0 0.0
        %588 = vmatpush1.msra.mxu0 %v380
        %589 = vmatprep.subr.mxu0 0.0
        %590 = vmatpush1.msra.mxu0 %v381
        %591 = vmatprep.subr.mxu0 0.0
        %592 = vmatpush1.msra.mxu0 %v382
        %593 = vmatprep.subr.mxu0 0.0
        %594 = vmatpush1.msra.mxu0 %v383
        %595 = vmatprep.subr.mxu0 0.0
        %596 = vmatpush1.msra.mxu0 %v384
        %597 = vmatprep.subr.mxu0 0.0
        %598 = vmatpush1.msra.mxu0 %v385
        %599 = vmatprep.subr.mxu0 0.0
        %600 = vmatpush1.msra.mxu0 %v386
        %601 = vmatprep.subr.mxu0 0.0
        %602 = vmatpush1.msra.mxu0 %v387
        %603 = vmatprep.subr.mxu0 0.0
        %604 = vmatpush1.msra.mxu0 %v388
        %605 = vmatprep.subr.mxu0 0.0
        %606 = vmatpush1.msra.mxu0 %v389
        %607 = vmatprep.subr.mxu0 0.0
        %608 = vmatpush1.msra.mxu0 0.0
        %609 = vmatprep.subr.mxu0 0.0
        %610 = vmatpush1.msra.mxu0 0.0
        %611 = vmatprep.subr.mxu0 0.0
        %612 = vmatpush1.msra.mxu0 0.0
        %613 = vmatprep.subr.mxu0 0.0
        %614 = vmatpush1.msra.mxu0 0.0
        %615 = vmatprep.subr.mxu0 0.0
        %616 = vmatpush1.msra.mxu0 0.0
        %617 = vmatprep.subr.mxu0 0.0
        %618 = vmatpush1.msra.mxu0 0.0
        %619 = vmatprep.subr.mxu0 0.0
        %620 = vmatpush1.msra.mxu0 0.0
        %621 = vmatprep.subr.mxu0 0.0
        %622 = vmatpush1.msra.mxu0 0.0
        %623 = vmatprep.subr.mxu0 0.0
        %624 = vmatpush1.msra.mxu0 0.0
        %625 = vmatprep.subr.mxu0 0.0
        %626 = vmatpush1.msra.mxu0 0.0
        %627 = vmatprep.subr.mxu0 0.0
        %628 = vmatpush1.msra.mxu0 0.0
        %629 = vmatprep.subr.mxu0 0.0
        %630 = vmatpush1.msra.mxu0 0.0
        %631 = vmatprep.subr.mxu0 0.0
        %632 = vmatpush1.msra.mxu0 0.0
        %633 = vmatprep.subr.mxu0 0.0
        %634 = vmatpush1.msra.mxu0 0.0
        %635 = vmatprep.subr.mxu0 0.0
        %636 = vmatpush1.msra.mxu0 0.0
        %637 = vmatprep.subr.mxu0 0.0
        %638 = vmatpush1.msra.mxu0 0.0
        %639 = vmatprep.mubr.f32.mxu0 0.0
        %640 = vmatmul.mubr.f32.gmra.mrb[0].mxu0 %v569
        %v641 = vpop.f32.mrb[0].mxu0
        %v642 = vadd.f32 %v574, %v641
        %v643 = vpop.f32.mrb[0].mxu0
        %644 = vmatprep.mubr.f32.mxu0 0.0
        %645 = vmatmul.mubr.f32.gmra.mrb[0].mxu0 %v570
        %v646 = vpop.f32.mrb[0].mxu0
        %v647 = vadd.f32 %v574, %v646
        %v648 = vpop.f32.mrb[0].mxu0
        %649 = vdwg.mxu0
        %652 = vrot.lane.b32.xlu0 %v480, 96
        %v653 = vpop.permute.xlu0 %652
        %654 = vrot.lane.b32.xlu0 %v485, 96
        %v655 = vpop.permute.xlu0 %654
        %656 = vrot.lane.b32.xlu0 %v480, 64
        %v657 = vpop.permute.xlu0 %656
        %658 = vrot.lane.b32.xlu0 %v485, 64
        %v659 = vpop.permute.xlu0 %658
        %660 = vrot.lane.b32.xlu0 %v480, 32
        %v661 = vpop.permute.xlu0 %660
        %662 = vrot.lane.b32.xlu0 %v485, 32
        %v663 = vpop.permute.xlu0 %662
        %666 = vrot.lane.b32.xlu0 %v561, 96
        %v667 = vpop.permute.xlu0 %666
        %668 = vrot.lane.b32.xlu0 %v566, 96
        %v669 = vpop.permute.xlu0 %668
        %670 = vrot.lane.b32.xlu0 %v561, 64
        %v671 = vpop.permute.xlu0 %670
        %672 = vrot.lane.b32.xlu0 %v566, 64
        %v673 = vpop.permute.xlu0 %672
        %674 = vrot.lane.b32.xlu0 %v561, 32
        %v675 = vpop.permute.xlu0 %674
        %676 = vrot.lane.b32.xlu0 %v566, 32
        %v677 = vpop.permute.xlu0 %676
        %680 = vrot.lane.b32.xlu0 %v642, 96
        %v681 = vpop.permute.xlu0 %680
        %682 = vrot.lane.b32.xlu0 %v647, 96
        %v683 = vpop.permute.xlu0 %682
        %686 = vrot.lane.b32.xlu0 %v642, 64
        %v687 = vpop.permute.xlu0 %686
        %688 = vrot.lane.b32.xlu0 %v647, 64
        %v689 = vpop.permute.xlu0 %688
        %692 = vrot.lane.b32.xlu0 %v642, 32
        %v693 = vpop.permute.xlu0 %692
        %694 = vrot.lane.b32.xlu0 %v647, 32
        %v695 = vpop.permute.xlu0 %694
        %vm698 = vcmask 261120
        %v699 = vsel %vm698, %v480, 0
        %v701 = vsel %vm698, %v485, 0
        %v703 = vsel %vm698, %v561, 0
        %v705 = vsel %vm698, %v566, 0
        %707 = vmatprep.subr.mxu0 0.0
        %708 = vmatpush1.xpose.msra.mxu0 %v703
        %709 = vmatprep.subr.mxu0 0.0
        %710 = vmatpush1.xpose.msra.mxu0 %v705
        %711 = vmatprep.subr.mxu0 0.0
        %712 = vmatpush1.xpose.msra.mxu0 0.0
        %713 = vmatprep.subr.mxu0 0.0
        %714 = vmatpush1.xpose.msra.mxu0 0.0
        %715 = vmatprep.subr.mxu0 0.0
        %716 = vmatpush1.xpose.msra.mxu0 0.0
        %717 = vmatprep.subr.mxu0 0.0
        %718 = vmatpush1.xpose.msra.mxu0 0.0
        %719 = vmatprep.subr.mxu0 0.0
        %720 = vmatpush1.xpose.msra.mxu0 0.0
        %721 = vmatprep.subr.mxu0 0.0
        %722 = vmatpush1.xpose.msra.mxu0 0.0
        %723 = vmatprep.subr.mxu0 0.0
        %724 = vmatpush1.xpose.msra.mxu0 0.0
        %725 = vmatprep.subr.mxu0 0.0
        %726 = vmatpush1.xpose.msra.mxu0 0.0
        %727 = vmatprep.subr.mxu0 0.0
        %728 = vmatpush1.xpose.msra.mxu0 0.0
        %729 = vmatprep.subr.mxu0 0.0
        %730 = vmatpush1.xpose.msra.mxu0 0.0
        %731 = vmatprep.subr.mxu0 0.0
        %732 = vmatpush1.xpose.msra.mxu0 0.0
        %733 = vmatprep.subr.mxu0 0.0
        %734 = vmatpush1.xpose.msra.mxu0 0.0
        %735 = vmatprep.subr.mxu0 0.0
        %736 = vmatpush1.xpose.msra.mxu0 0.0
        %737 = vmatprep.subr.mxu0 0.0
        %738 = vmatpush1.xpose.msra.mxu0 0.0
        %739 = vmatprep.subr.mxu0 0.0
        %740 = vmatpush1.xpose.msra.mxu0 0.0
        %741 = vmatprep.subr.mxu0 0.0
        %742 = vmatpush1.xpose.msra.mxu0 0.0
        %743 = vmatprep.subr.mxu0 0.0
        %744 = vmatpush1.xpose.msra.mxu0 0.0
        %745 = vmatprep.subr.mxu0 0.0
        %746 = vmatpush1.xpose.msra.mxu0 0.0
        %747 = vmatprep.subr.mxu0 0.0
        %748 = vmatpush1.xpose.msra.mxu0 0.0
        %749 = vmatprep.subr.mxu0 0.0
        %750 = vmatpush1.xpose.msra.mxu0 0.0
        %751 = vmatprep.subr.mxu0 0.0
        %752 = vmatpush1.xpose.msra.mxu0 0.0
        %753 = vmatprep.subr.mxu0 0.0
        %754 = vmatpush1.xpose.msra.mxu0 0.0
        %755 = vmatprep.subr.mxu0 0.0
        %756 = vmatpush1.xpose.msra.mxu0 0.0
        %757 = vmatprep.subr.mxu0 0.0
        %758 = vmatpush1.xpose.msra.mxu0 0.0
        %759 = vmatprep.subr.mxu0 0.0
        %760 = vmatpush1.xpose.msra.mxu0 0.0
        %761 = vmatprep.subr.mxu0 0.0
        %762 = vmatpush1.xpose.msra.mxu0 0.0
        %763 = vmatprep.subr.mxu0 0.0
        %764 = vmatpush1.xpose.msra.mxu0 0.0
        %765 = vmatprep.subr.mxu0 0.0
        %766 = vmatpush1.xpose.msra.mxu0 0.0
        %767 = vmatprep.subr.mxu0 0.0
        %768 = vmatpush1.xpose.msra.mxu0 0.0
        %769 = vmatprep.subr.mxu0 0.0
        %770 = vmatpush1.xpose.msra.mxu0 0.0
        %771 = vmatprep.mubr.f32.mxu0 0.0
        %772 = vmatmul.mubr.f32.gmra.mrb[0].mxu0 %v699
        %v773 = vpop.f32.mrb[0].mxu0
        %v774 = vadd.f32 0.0, %v773
        %v775 = vpop.f32.mrb[0].mxu0
        %776 = vmatprep.mubr.f32.mxu0 0.0
        %777 = vmatmul.mubr.f32.gmra.mrb[0].mxu0 %v701
        %v778 = vpop.f32.mrb[0].mxu0
        %v779 = vadd.f32 0.0, %v778
        %v780 = vpop.f32.mrb[0].mxu0
        %781 = vdwg.mxu0
        %v782 = vsel %vm698, %v653, 0
        %v784 = vsel %vm698, %v655, 0
        %v786 = vsel %vm698, %v667, 0
        %v788 = vsel %vm698, %v669, 0
        %790 = vmatprep.subr.mxu0 0.0
        %791 = vmatpush1.xpose.msra.mxu0 %v786
        %792 = vmatprep.subr.mxu0 0.0
        %793 = vmatpush1.xpose.msra.mxu0 %v788
        %794 = vmatprep.subr.mxu0 0.0
        %795 = vmatpush1.xpose.msra.mxu0 0.0
        %796 = vmatprep.subr.mxu0 0.0
        %797 = vmatpush1.xpose.msra.mxu0 0.0
        %798 = vmatprep.subr.mxu0 0.0
        %799 = vmatpush1.xpose.msra.mxu0 0.0
        %800 = vmatprep.subr.mxu0 0.0
        %801 = vmatpush1.xpose.msra.mxu0 0.0
        %802 = vmatprep.subr.mxu0 0.0
        %803 = vmatpush1.xpose.msra.mxu0 0.0
        %804 = vmatprep.subr.mxu0 0.0
        %805 = vmatpush1.xpose.msra.mxu0 0.0
        %806 = vmatprep.subr.mxu0 0.0
        %807 = vmatpush1.xpose.msra.mxu0 0.0
        %808 = vmatprep.subr.mxu0 0.0
        %809 = vmatpush1.xpose.msra.mxu0 0.0
        %810 = vmatprep.subr.mxu0 0.0
        %811 = vmatpush1.xpose.msra.mxu0 0.0
        %812 = vmatprep.subr.mxu0 0.0
        %813 = vmatpush1.xpose.msra.mxu0 0.0
        %814 = vmatprep.subr.mxu0 0.0
        %815 = vmatpush1.xpose.msra.mxu0 0.0
        %816 = vmatprep.subr.mxu0 0.0
        %817 = vmatpush1.xpose.msra.mxu0 0.0
        %818 = vmatprep.subr.mxu0 0.0
        %819 = vmatpush1.xpose.msra.mxu0 0.0
        %820 = vmatprep.subr.mxu0 0.0
        %821 = vmatpush1.xpose.msra.mxu0 0.0
        %822 = vmatprep.subr.mxu0 0.0
        %823 = vmatpush1.xpose.msra.mxu0 0.0
        %824 = vmatprep.subr.mxu0 0.0
        %825 = vmatpush1.xpose.msra.mxu0 0.0
        %826 = vmatprep.subr.mxu0 0.0
        %827 = vmatpush1.xpose.msra.mxu0 0.0
        %828 = vmatprep.subr.mxu0 0.0
        %829 = vmatpush1.xpose.msra.mxu0 0.0
        %830 = vmatprep.subr.mxu0 0.0
        %831 = vmatpush1.xpose.msra.mxu0 0.0
        %832 = vmatprep.subr.mxu0 0.0
        %833 = vmatpush1.xpose.msra.mxu0 0.0
        %834 = vmatprep.subr.mxu0 0.0
        %835 = vmatpush1.xpose.msra.mxu0 0.0
        %836 = vmatprep.subr.mxu0 0.0
        %837 = vmatpush1.xpose.msra.mxu0 0.0
        %838 = vmatprep.subr.mxu0 0.0
        %839 = vmatpush1.xpose.msra.mxu0 0.0
        %840 = vmatprep.subr.mxu0 0.0
        %841 = vmatpush1.xpose.msra.mxu0 0.0
        %842 = vmatprep.subr.mxu0 0.0
        %843 = vmatpush1.xpose.msra.mxu0 0.0
        %844 = vmatprep.subr.mxu0 0.0
        %845 = vmatpush1.xpose.msra.mxu0 0.0
        %846 = vmatprep.subr.mxu0 0.0
        %847 = vmatpush1.xpose.msra.mxu0 0.0
        %848 = vmatprep.subr.mxu0 0.0
        %849 = vmatpush1.xpose.msra.mxu0 0.0
        %850 = vmatprep.subr.mxu0 0.0
        %851 = vmatpush1.xpose.msra.mxu0 0.0
        %852 = vmatprep.subr.mxu0 0.0
        %853 = vmatpush1.xpose.msra.mxu0 0.0
        %854 = vmatprep.mubr.f32.mxu0 0.0
        %855 = vmatmul.mubr.f32.gmra.mrb[0].mxu0 %v782
        %v856 = vpop.f32.mrb[0].mxu0
        %v857 = vadd.f32 0.0, %v856
        %v858 = vpop.f32.mrb[0].mxu0
        %859 = vmatprep.mubr.f32.mxu0 0.0
        %860 = vmatmul.mubr.f32.gmra.mrb[0].mxu0 %v784
        %v861 = vpop.f32.mrb[0].mxu0
        %v862 = vadd.f32 0.0, %v861
        %v863 = vpop.f32.mrb[0].mxu0
        %864 = vdwg.mxu0
        %v865 = vsel %vm698, %v657, 0
        %v867 = vsel %vm698, %v659, 0
        %v869 = vsel %vm698, %v671, 0
        %v871 = vsel %vm698, %v673, 0
        %873 = vmatprep.subr.mxu0 0.0
        %874 = vmatpush1.xpose.msra.mxu0 %v869
        %875 = vmatprep.subr.mxu0 0.0
        %876 = vmatpush1.xpose.msra.mxu0 %v871
        %877 = vmatprep.subr.mxu0 0.0
        %878 = vmatpush1.xpose.msra.mxu0 0.0
        %879 = vmatprep.subr.mxu0 0.0
        %880 = vmatpush1.xpose.msra.mxu0 0.0
        %881 = vmatprep.subr.mxu0 0.0
        %882 = vmatpush1.xpose.msra.mxu0 0.0
        %883 = vmatprep.subr.mxu0 0.0
        %884 = vmatpush1.xpose.msra.mxu0 0.0
        %885 = vmatprep.subr.mxu0 0.0
        %886 = vmatpush1.xpose.msra.mxu0 0.0
        %887 = vmatprep.subr.mxu0 0.0
        %888 = vmatpush1.xpose.msra.mxu0 0.0
        %889 = vmatprep.subr.mxu0 0.0
        %890 = vmatpush1.xpose.msra.mxu0 0.0
        %891 = vmatprep.subr.mxu0 0.0
        %892 = vmatpush1.xpose.msra.mxu0 0.0
        %893 = vmatprep.subr.mxu0 0.0
        %894 = vmatpush1.xpose.msra.mxu0 0.0
        %895 = vmatprep.subr.mxu0 0.0
        %896 = vmatpush1.xpose.msra.mxu0 0.0
        %897 = vmatprep.subr.mxu0 0.0
        %898 = vmatpush1.xpose.msra.mxu0 0.0
        %899 = vmatprep.subr.mxu0 0.0
        %900 = vmatpush1.xpose.msra.mxu0 0.0
        %901 = vmatprep.subr.mxu0 0.0
        %902 = vmatpush1.xpose.msra.mxu0 0.0
        %903 = vmatprep.subr.mxu0 0.0
        %904 = vmatpush1.xpose.msra.mxu0 0.0
        %905 = vmatprep.subr.mxu0 0.0
        %906 = vmatpush1.xpose.msra.mxu0 0.0
        %907 = vmatprep.subr.mxu0 0.0
        %908 = vmatpush1.xpose.msra.mxu0 0.0
        %909 = vmatprep.subr.mxu0 0.0
        %910 = vmatpush1.xpose.msra.mxu0 0.0
        %911 = vmatprep.subr.mxu0 0.0
        %912 = vmatpush1.xpose.msra.mxu0 0.0
        %913 = vmatprep.subr.mxu0 0.0
        %914 = vmatpush1.xpose.msra.mxu0 0.0
        %915 = vmatprep.subr.mxu0 0.0
        %916 = vmatpush1.xpose.msra.mxu0 0.0
        %917 = vmatprep.subr.mxu0 0.0
        %918 = vmatpush1.xpose.msra.mxu0 0.0
        %919 = vmatprep.subr.mxu0 0.0
        %920 = vmatpush1.xpose.msra.mxu0 0.0
        %921 = vmatprep.subr.mxu0 0.0
        %922 = vmatpush1.xpose.msra.mxu0 0.0
        %923 = vmatprep.subr.mxu0 0.0
        %924 = vmatpush1.xpose.msra.mxu0 0.0
        %925 = vmatprep.subr.mxu0 0.0
        %926 = vmatpush1.xpose.msra.mxu0 0.0
        %927 = vmatprep.subr.mxu0 0.0
        %928 = vmatpush1.xpose.msra.mxu0 0.0
        %929 = vmatprep.subr.mxu0 0.0
        %930 = vmatpush1.xpose.msra.mxu0 0.0
        %931 = vmatprep.subr.mxu0 0.0
        %932 = vmatpush1.xpose.msra.mxu0 0.0
        %933 = vmatprep.subr.mxu0 0.0
        %934 = vmatpush1.xpose.msra.mxu0 0.0
        %935 = vmatprep.subr.mxu0 0.0
        %936 = vmatpush1.xpose.msra.mxu0 0.0
        %937 = vmatprep.mubr.f32.mxu0 0.0
        %938 = vmatmul.mubr.f32.gmra.mrb[0].mxu0 %v865
        %v939 = vpop.f32.mrb[0].mxu0
        %v940 = vadd.f32 0.0, %v939
        %v941 = vpop.f32.mrb[0].mxu0
        %942 = vmatprep.mubr.f32.mxu0 0.0
        %943 = vmatmul.mubr.f32.gmra.mrb[0].mxu0 %v867
        %v944 = vpop.f32.mrb[0].mxu0
        %v945 = vadd.f32 0.0, %v944
        %v946 = vpop.f32.mrb[0].mxu0
        %947 = vdwg.mxu0
        %v948 = vsel %vm698, %v661, 0
        %v950 = vsel %vm698, %v663, 0
        %v952 = vsel %vm698, %v675, 0
        %v954 = vsel %vm698, %v677, 0
        %956 = vmatprep.subr.mxu0 0.0
        %957 = vmatpush1.xpose.msra.mxu0 %v952
        %958 = vmatprep.subr.mxu0 0.0
        %959 = vmatpush1.xpose.msra.mxu0 %v954
        %960 = vmatprep.subr.mxu0 0.0
        %961 = vmatpush1.xpose.msra.mxu0 0.0
        %962 = vmatprep.subr.mxu0 0.0
        %963 = vmatpush1.xpose.msra.mxu0 0.0
        %964 = vmatprep.subr.mxu0 0.0
        %965 = vmatpush1.xpose.msra.mxu0 0.0
        %966 = vmatprep.subr.mxu0 0.0
        %967 = vmatpush1.xpose.msra.mxu0 0.0
        %968 = vmatprep.subr.mxu0 0.0
        %969 = vmatpush1.xpose.msra.mxu0 0.0
        %970 = vmatprep.subr.mxu0 0.0
        %971 = vmatpush1.xpose.msra.mxu0 0.0
        %972 = vmatprep.subr.mxu0 0.0
        %973 = vmatpush1.xpose.msra.mxu0 0.0
        %974 = vmatprep.subr.mxu0 0.0
        %975 = vmatpush1.xpose.msra.mxu0 0.0
        %976 = vmatprep.subr.mxu0 0.0
        %977 = vmatpush1.xpose.msra.mxu0 0.0
        %978 = vmatprep.subr.mxu0 0.0
        %979 = vmatpush1.xpose.msra.mxu0 0.0
        %980 = vmatprep.subr.mxu0 0.0
        %981 = vmatpush1.xpose.msra.mxu0 0.0
        %982 = vmatprep.subr.mxu0 0.0
        %983 = vmatpush1.xpose.msra.mxu0 0.0
        %984 = vmatprep.subr.mxu0 0.0
        %985 = vmatpush1.xpose.msra.mxu0 0.0
        %986 = vmatprep.subr.mxu0 0.0
        %987 = vmatpush1.xpose.msra.mxu0 0.0
        %988 = vmatprep.subr.mxu0 0.0
        %989 = vmatpush1.xpose.msra.mxu0 0.0
        %990 = vmatprep.subr.mxu0 0.0
        %991 = vmatpush1.xpose.msra.mxu0 0.0
        %992 = vmatprep.subr.mxu0 0.0
        %993 = vmatpush1.xpose.msra.mxu0 0.0
        %994 = vmatprep.subr.mxu0 0.0
        %995 = vmatpush1.xpose.msra.mxu0 0.0
        %996 = vmatprep.subr.mxu0 0.0
        %997 = vmatpush1.xpose.msra.mxu0 0.0
        %998 = vmatprep.subr.mxu0 0.0
        %999 = vmatpush1.xpose.msra.mxu0 0.0
        %1000 = vmatprep.subr.mxu0 0.0
        %1001 = vmatpush1.xpose.msra.mxu0 0.0
        %1002 = vmatprep.subr.mxu0 0.0
        %1003 = vmatpush1.xpose.msra.mxu0 0.0
        %1004 = vmatprep.subr.mxu0 0.0
        %1005 = vmatpush1.xpose.msra.mxu0 0.0
        %1006 = vmatprep.subr.mxu0 0.0
        %1007 = vmatpush1.xpose.msra.mxu0 0.0
        %1008 = vmatprep.subr.mxu0 0.0
        %1009 = vmatpush1.xpose.msra.mxu0 0.0
        %1010 = vmatprep.subr.mxu0 0.0
        %1011 = vmatpush1.xpose.msra.mxu0 0.0
        %1012 = vmatprep.subr.mxu0 0.0
        %1013 = vmatpush1.xpose.msra.mxu0 0.0
        %1014 = vmatprep.subr.mxu0 0.0
        %1015 = vmatpush1.xpose.msra.mxu0 0.0
        %1016 = vmatprep.subr.mxu0 0.0
        %1017 = vmatpush1.xpose.msra.mxu0 0.0
        %1018 = vmatprep.subr.mxu0 0.0
        %1019 = vmatpush1.xpose.msra.mxu0 0.0
        %1020 = vmatprep.mubr.f32.mxu0 0.0
        %1021 = vmatmul.mubr.f32.gmra.mrb[0].mxu0 %v948
        %v1022 = vpop.f32.mrb[0].mxu0
        %v1023 = vadd.f32 0.0, %v1022
        %v1024 = vpop.f32.mrb[0].mxu0
        %1025 = vmatprep.mubr.f32.mxu0 0.0
        %1026 = vmatmul.mubr.f32.gmra.mrb[0].mxu0 %v950
        %v1027 = vpop.f32.mrb[0].mxu0
        %v1028 = vadd.f32 0.0, %v1027
        %v1029 = vpop.f32.mrb[0].mxu0
        %1030 = vdwg.mxu0
        %v1031 = vmul.f32 %v774, 0.088388346
        %v1032 = vmul.f32 %v779, 0.088388346
        %v1033 = vmul.f32 %v857, 0.088388346
        %v1034 = vmul.f32 %v862, 0.088388346
        %v1035 = vmul.f32 %v940, 0.088388346
        %v1036 = vmul.f32 %v945, 0.088388346
        %v1037 = vmul.f32 %v1023, 0.088388346
        %v1038 = vmul.f32 %v1028, 0.088388346
        %vm1039 = vcmask 130048
        %v1040 = vsel %vm1039, %v1031, -inf
        %v1041 = vsel %vm1039, %v1032, -inf
        %v1042 = vmax.f32 %v1040, %v1041
        %v1043 = vrot.slane %v1042, 4
        %v1044 = vmax.f32 %v1042, %v1043
        %v1045 = vrot.slane %v1044, 2
        %v1046 = vmax.f32 %v1044, %v1045
        %v1047 = vrot.slane %v1046, 1
        %v1048 = vmax.f32 %v1046, %v1047
        %v1049 = vsel %vm1039, %v1033, -inf
        %v1050 = vsel %vm1039, %v1034, -inf
        %v1051 = vmax.f32 %v1049, %v1050
        %v1052 = vrot.slane %v1051, 4
        %v1053 = vmax.f32 %v1051, %v1052
        %v1054 = vrot.slane %v1053, 2
        %v1055 = vmax.f32 %v1053, %v1054
        %v1056 = vrot.slane %v1055, 1
        %v1057 = vmax.f32 %v1055, %v1056
        %v1058 = vsel %vm1039, %v1035, -inf
        %v1059 = vsel %vm1039, %v1036, -inf
        %v1060 = vmax.f32 %v1058, %v1059
        %v1061 = vrot.slane %v1060, 4
        %v1062 = vmax.f32 %v1060, %v1061
        %v1063 = vrot.slane %v1062, 2
        %v1064 = vmax.f32 %v1062, %v1063
        %v1065 = vrot.slane %v1064, 1
        %v1066 = vmax.f32 %v1064, %v1065
        %v1067 = vsel %vm1039, %v1037, -inf
        %v1068 = vsel %vm1039, %v1038, -inf
        %v1069 = vmax.f32 %v1067, %v1068
        %v1070 = vrot.slane %v1069, 4
        %v1071 = vmax.f32 %v1069, %v1070
        %v1072 = vrot.slane %v1071, 2
        %v1073 = vmax.f32 %v1071, %v1072
        %v1074 = vrot.slane %v1073, 1
        %v1075 = vmax.f32 %v1073, %v1074
        %v1076 = vsub.f32 %v1031, %v1048
        %v1077 = vsub.f32 %v1032, %v1048
        %v1078 = vsub.f32 %v1033, %v1057
        %v1079 = vsub.f32 %v1034, %v1057
        %v1080 = vsub.f32 %v1035, %v1066
        %v1081 = vsub.f32 %v1036, %v1066
        %v1082 = vsub.f32 %v1037, %v1075
        %v1083 = vsub.f32 %v1038, %v1075
        %v1084 = vmul.f32 %v1076, 1.442695
        %v1085 = vpow.pop %v1084
        %v1086 = vmul.f32 %v1077, 1.442695
        %v1087 = vpow.pop %v1086
        %v1088 = vmul.f32 %v1078, 1.442695
        %v1089 = vpow.pop %v1088
        %v1090 = vmul.f32 %v1079, 1.442695
        %v1091 = vpow.pop %v1090
        %v1092 = vmul.f32 %v1080, 1.442695
        %v1093 = vpow.pop %v1092
        %v1094 = vmul.f32 %v1081, 1.442695
        %v1095 = vpow.pop %v1094
        %v1096 = vmul.f32 %v1082, 1.442695
        %v1097 = vpow.pop %v1096
        %v1098 = vmul.f32 %v1083, 1.442695
        %v1099 = vpow.pop %v1098
        %v1100 = vsel %vm1039, %v1085, 0.0
        %v1101 = vsel %vm1039, %v1087, 0.0
        %v1102 = vadd.f32 %v1100, %v1101
        %v1103 = vrot.slane %v1102, 4
        %v1104 = vadd.f32 %v1102, %v1103
        %v1105 = vrot.slane %v1104, 2
        %v1106 = vadd.f32 %v1104, %v1105
        %v1107 = vrot.slane %v1106, 1
        %v1108 = vadd.f32 %v1106, %v1107
        %v1109 = vsel %vm1039, %v1089, 0.0
        %v1110 = vsel %vm1039, %v1091, 0.0
        %v1111 = vadd.f32 %v1109, %v1110
        %v1112 = vrot.slane %v1111, 4
        %v1113 = vadd.f32 %v1111, %v1112
        %v1114 = vrot.slane %v1113, 2
        %v1115 = vadd.f32 %v1113, %v1114
        %v1116 = vrot.slane %v1115, 1
        %v1117 = vadd.f32 %v1115, %v1116
        %v1118 = vsel %vm1039, %v1093, 0.0
        %v1119 = vsel %vm1039, %v1095, 0.0
        %v1120 = vadd.f32 %v1118, %v1119
        %v1121 = vrot.slane %v1120, 4
        %v1122 = vadd.f32 %v1120, %v1121
        %v1123 = vrot.slane %v1122, 2
        %v1124 = vadd.f32 %v1122, %v1123
        %v1125 = vrot.slane %v1124, 1
        %v1126 = vadd.f32 %v1124, %v1125
        %v1127 = vsel %vm1039, %v1097, 0.0
        %v1128 = vsel %vm1039, %v1099, 0.0
        %v1129 = vadd.f32 %v1127, %v1128
        %v1130 = vrot.slane %v1129, 4
        %v1131 = vadd.f32 %v1129, %v1130
        %v1132 = vrot.slane %v1131, 2
        %v1133 = vadd.f32 %v1131, %v1132
        %v1134 = vrot.slane %v1133, 1
        %v1135 = vadd.f32 %v1133, %v1134
        %v1136 = vrcp.pop %v1108
        %v1137 = vmul.f32 %v1085, %v1136
        %v1138 = vmul.f32 %v1087, %v1136
        %v1139 = vrcp.pop %v1117
        %v1140 = vmul.f32 %v1089, %v1139
        %v1141 = vmul.f32 %v1091, %v1139
        %v1142 = vrcp.pop %v1126
        %v1143 = vmul.f32 %v1093, %v1142
        %v1144 = vmul.f32 %v1095, %v1142
        %v1145 = vrcp.pop %v1135
        %v1146 = vmul.f32 %v1097, %v1145
        %v1147 = vmul.f32 %v1099, %v1145
        %v1149 = vsel %vm1039, %v1137, 0
        %v1152 = vsel %vm1039, %v1138, 0
        %1154 = vmatprep.subr.mxu0 0.0
        %1155 = vmatpush1.msra.mxu0 %v642
        %1156 = vmatprep.subr.mxu0 0.0
        %1157 = vmatpush1.msra.mxu0 %v647
        %1158 = vmatprep.subr.mxu0 0.0
        %1159 = vmatpush1.msra.mxu0 0.0
        %1160 = vmatprep.subr.mxu0 0.0
        %1161 = vmatpush1.msra.mxu0 0.0
        %1162 = vmatprep.subr.mxu0 0.0
        %1163 = vmatpush1.msra.mxu0 0.0
        %1164 = vmatprep.subr.mxu0 0.0
        %1165 = vmatpush1.msra.mxu0 0.0
        %1166 = vmatprep.subr.mxu0 0.0
        %1167 = vmatpush1.msra.mxu0 0.0
        %1168 = vmatprep.subr.mxu0 0.0
        %1169 = vmatpush1.msra.mxu0 0.0
        %1170 = vmatprep.subr.mxu0 0.0
        %1171 = vmatpush1.msra.mxu0 0.0
        %1172 = vmatprep.subr.mxu0 0.0
        %1173 = vmatpush1.msra.mxu0 0.0
        %1174 = vmatprep.subr.mxu0 0.0
        %1175 = vmatpush1.msra.mxu0 0.0
        %1176 = vmatprep.subr.mxu0 0.0
        %1177 = vmatpush1.msra.mxu0 0.0
        %1178 = vmatprep.subr.mxu0 0.0
        %1179 = vmatpush1.msra.mxu0 0.0
        %1180 = vmatprep.subr.mxu0 0.0
        %1181 = vmatpush1.msra.mxu0 0.0
        %1182 = vmatprep.subr.mxu0 0.0
        %1183 = vmatpush1.msra.mxu0 0.0
        %1184 = vmatprep.subr.mxu0 0.0
        %1185 = vmatpush1.msra.mxu0 0.0
        %1186 = vmatprep.subr.mxu0 0.0
        %1187 = vmatpush1.msra.mxu0 0.0
        %1188 = vmatprep.subr.mxu0 0.0
        %1189 = vmatpush1.msra.mxu0 0.0
        %1190 = vmatprep.subr.mxu0 0.0
        %1191 = vmatpush1.msra.mxu0 0.0
        %1192 = vmatprep.subr.mxu0 0.0
        %1193 = vmatpush1.msra.mxu0 0.0
        %1194 = vmatprep.subr.mxu0 0.0
        %1195 = vmatpush1.msra.mxu0 0.0
        %1196 = vmatprep.subr.mxu0 0.0
        %1197 = vmatpush1.msra.mxu0 0.0
        %1198 = vmatprep.subr.mxu0 0.0
        %1199 = vmatpush1.msra.mxu0 0.0
        %1200 = vmatprep.subr.mxu0 0.0
        %1201 = vmatpush1.msra.mxu0 0.0
        %1202 = vmatprep.subr.mxu0 0.0
        %1203 = vmatpush1.msra.mxu0 0.0
        %1204 = vmatprep.subr.mxu0 0.0
        %1205 = vmatpush1.msra.mxu0 0.0
        %1206 = vmatprep.subr.mxu0 0.0
        %1207 = vmatpush1.msra.mxu0 0.0
        %1208 = vmatprep.subr.mxu0 0.0
        %1209 = vmatpush1.msra.mxu0 0.0
        %1210 = vmatprep.subr.mxu0 0.0
        %1211 = vmatpush1.msra.mxu0 0.0
        %1212 = vmatprep.subr.mxu0 0.0
        %1213 = vmatpush1.msra.mxu0 0.0
        %1214 = vmatprep.subr.mxu0 0.0
        %1215 = vmatpush1.msra.mxu0 0.0
        %1216 = vmatprep.subr.mxu0 0.0
        %1217 = vmatpush1.msra.mxu0 0.0
        %1218 = vmatprep.mubr.f32.mxu0 0.0
        %1219 = vmatmul.mubr.f32.gmra.mrb[0].mxu0 %v1149
        %v1220 = vpop.f32.mrb[0].mxu0
        %v1221 = vadd.f32 0.0, %v1220
        %v1222 = vpop.f32.mrb[0].mxu0
        %1223 = vmatprep.mubr.f32.mxu0 0.0
        %1224 = vmatmul.mubr.f32.gmra.mrb[0].mxu0 %v1152
        %v1225 = vpop.f32.mrb[0].mxu0
        %v1226 = vadd.f32 0.0, %v1225
        %v1227 = vpop.f32.mrb[0].mxu0
        %1228 = vdwg.mxu0
        %v1230 = vsel %vm1039, %v1140, 0
        %v1233 = vsel %vm1039, %v1141, 0
        %1235 = vmatprep.subr.mxu0 0.0
        %1236 = vmatpush1.msra.mxu0 %v681
        %1237 = vmatprep.subr.mxu0 0.0
        %1238 = vmatpush1.msra.mxu0 %v683
        %1239 = vmatprep.subr.mxu0 0.0
        %1240 = vmatpush1.msra.mxu0 0.0
        %1241 = vmatprep.subr.mxu0 0.0
        %1242 = vmatpush1.msra.mxu0 0.0
        %1243 = vmatprep.subr.mxu0 0.0
        %1244 = vmatpush1.msra.mxu0 0.0
        %1245 = vmatprep.subr.mxu0 0.0
        %1246 = vmatpush1.msra.mxu0 0.0
        %1247 = vmatprep.subr.mxu0 0.0
        %1248 = vmatpush1.msra.mxu0 0.0
        %1249 = vmatprep.subr.mxu0 0.0
        %1250 = vmatpush1.msra.mxu0 0.0
        %1251 = vmatprep.subr.mxu0 0.0
        %1252 = vmatpush1.msra.mxu0 0.0
        %1253 = vmatprep.subr.mxu0 0.0
        %1254 = vmatpush1.msra.mxu0 0.0
        %1255 = vmatprep.subr.mxu0 0.0
        %1256 = vmatpush1.msra.mxu0 0.0
        %1257 = vmatprep.subr.mxu0 0.0
        %1258 = vmatpush1.msra.mxu0 0.0
        %1259 = vmatprep.subr.mxu0 0.0
        %1260 = vmatpush1.msra.mxu0 0.0
        %1261 = vmatprep.subr.mxu0 0.0
        %1262 = vmatpush1.msra.mxu0 0.0
        %1263 = vmatprep.subr.mxu0 0.0
        %1264 = vmatpush1.msra.mxu0 0.0
        %1265 = vmatprep.subr.mxu0 0.0
        %1266 = vmatpush1.msra.mxu0 0.0
        %1267 = vmatprep.subr.mxu0 0.0
        %1268 = vmatpush1.msra.mxu0 0.0
        %1269 = vmatprep.subr.mxu0 0.0
        %1270 = vmatpush1.msra.mxu0 0.0
        %1271 = vmatprep.subr.mxu0 0.0
        %1272 = vmatpush1.msra.mxu0 0.0
        %1273 = vmatprep.subr.mxu0 0.0
        %1274 = vmatpush1.msra.mxu0 0.0
        %1275 = vmatprep.subr.mxu0 0.0
        %1276 = vmatpush1.msra.mxu0 0.0
        %1277 = vmatprep.subr.mxu0 0.0
        %1278 = vmatpush1.msra.mxu0 0.0
        %1279 = vmatprep.subr.mxu0 0.0
        %1280 = vmatpush1.msra.mxu0 0.0
        %1281 = vmatprep.subr.mxu0 0.0
        %1282 = vmatpush1.msra.mxu0 0.0
        %1283 = vmatprep.subr.mxu0 0.0
        %1284 = vmatpush1.msra.mxu0 0.0
        %1285 = vmatprep.subr.mxu0 0.0
        %1286 = vmatpush1.msra.mxu0 0.0
        %1287 = vmatprep.subr.mxu0 0.0
        %1288 = vmatpush1.msra.mxu0 0.0
        %1289 = vmatprep.subr.mxu0 0.0
        %1290 = vmatpush1.msra.mxu0 0.0
        %1291 = vmatprep.subr.mxu0 0.0
        %1292 = vmatpush1.msra.mxu0 0.0
        %1293 = vmatprep.subr.mxu0 0.0
        %1294 = vmatpush1.msra.mxu0 0.0
        %1295 = vmatprep.subr.mxu0 0.0
        %1296 = vmatpush1.msra.mxu0 0.0
        %1297 = vmatprep.subr.mxu0 0.0
        %1298 = vmatpush1.msra.mxu0 0.0
        %1299 = vmatprep.mubr.f32.mxu0 0.0
        %1300 = vmatmul.mubr.f32.gmra.mrb[0].mxu0 %v1230
        %v1301 = vpop.f32.mrb[0].mxu0
        %v1302 = vadd.f32 0.0, %v1301
        %v1303 = vpop.f32.mrb[0].mxu0
        %1304 = vmatprep.mubr.f32.mxu0 0.0
        %1305 = vmatmul.mubr.f32.gmra.mrb[0].mxu0 %v1233
        %v1306 = vpop.f32.mrb[0].mxu0
        %v1307 = vadd.f32 0.0, %v1306
        %v1308 = vpop.f32.mrb[0].mxu0
        %1309 = vdwg.mxu0
        %v1311 = vsel %vm1039, %v1143, 0
        %v1314 = vsel %vm1039, %v1144, 0
        %1316 = vmatprep.subr.mxu0 0.0
        %1317 = vmatpush1.msra.mxu0 %v687
        %1318 = vmatprep.subr.mxu0 0.0
        %1319 = vmatpush1.msra.mxu0 %v689
        %1320 = vmatprep.subr.mxu0 0.0
        %1321 = vmatpush1.msra.mxu0 0.0
        %1322 = vmatprep.subr.mxu0 0.0
        %1323 = vmatpush1.msra.mxu0 0.0
        %1324 = vmatprep.subr.mxu0 0.0
        %1325 = vmatpush1.msra.mxu0 0.0
        %1326 = vmatprep.subr.mxu0 0.0
        %1327 = vmatpush1.msra.mxu0 0.0
        %1328 = vmatprep.subr.mxu0 0.0
        %1329 = vmatpush1.msra.mxu0 0.0
        %1330 = vmatprep.subr.mxu0 0.0
        %1331 = vmatpush1.msra.mxu0 0.0
        %1332 = vmatprep.subr.mxu0 0.0
        %1333 = vmatpush1.msra.mxu0 0.0
        %1334 = vmatprep.subr.mxu0 0.0
        %1335 = vmatpush1.msra.mxu0 0.0
        %1336 = vmatprep.subr.mxu0 0.0
        %1337 = vmatpush1.msra.mxu0 0.0
        %1338 = vmatprep.subr.mxu0 0.0
        %1339 = vmatpush1.msra.mxu0 0.0
        %1340 = vmatprep.subr.mxu0 0.0
        %1341 = vmatpush1.msra.mxu0 0.0
        %1342 = vmatprep.subr.mxu0 0.0
        %1343 = vmatpush1.msra.mxu0 0.0
        %1344 = vmatprep.subr.mxu0 0.0
        %1345 = vmatpush1.msra.mxu0 0.0
        %1346 = vmatprep.subr.mxu0 0.0
        %1347 = vmatpush1.msra.mxu0 0.0
        %1348 = vmatprep.subr.mxu0 0.0
        %1349 = vmatpush1.msra.mxu0 0.0
        %1350 = vmatprep.subr.mxu0 0.0
        %1351 = vmatpush1.msra.mxu0 0.0
        %1352 = vmatprep.subr.mxu0 0.0
        %1353 = vmatpush1.msra.mxu0 0.0
        %1354 = vmatprep.subr.mxu0 0.0
        %1355 = vmatpush1.msra.mxu0 0.0
        %1356 = vmatprep.subr.mxu0 0.0
        %1357 = vmatpush1.msra.mxu0 0.0
        %1358 = vmatprep.subr.mxu0 0.0
        %1359 = vmatpush1.msra.mxu0 0.0
        %1360 = vmatprep.subr.mxu0 0.0
        %1361 = vmatpush1.msra.mxu0 0.0
        %1362 = vmatprep.subr.mxu0 0.0
        %1363 = vmatpush1.msra.mxu0 0.0
        %1364 = vmatprep.subr.mxu0 0.0
        %1365 = vmatpush1.msra.mxu0 0.0
        %1366 = vmatprep.subr.mxu0 0.0
        %1367 = vmatpush1.msra.mxu0 0.0
        %1368 = vmatprep.subr.mxu0 0.0
        %1369 = vmatpush1.msra.mxu0 0.0
        %1370 = vmatprep.subr.mxu0 0.0
        %1371 = vmatpush1.msra.mxu0 0.0
        %1372 = vmatprep.subr.mxu0 0.0
        %1373 = vmatpush1.msra.mxu0 0.0
        %1374 = vmatprep.subr.mxu0 0.0
        %1375 = vmatpush1.msra.mxu0 0.0
        %1376 = vmatprep.subr.mxu0 0.0
        %1377 = vmatpush1.msra.mxu0 0.0
        %1378 = vmatprep.subr.mxu0 0.0
        %1379 = vmatpush1.msra.mxu0 0.0
        %1380 = vmatprep.mubr.f32.mxu0 0.0
        %1381 = vmatmul.mubr.f32.gmra.mrb[0].mxu0 %v1311
        %v1382 = vpop.f32.mrb[0].mxu0
        %v1383 = vadd.f32 0.0, %v1382
        %v1384 = vpop.f32.mrb[0].mxu0
        %1385 = vmatprep.mubr.f32.mxu0 0.0
        %1386 = vmatmul.mubr.f32.gmra.mrb[0].mxu0 %v1314
        %v1387 = vpop.f32.mrb[0].mxu0
        %v1388 = vadd.f32 0.0, %v1387
        %v1389 = vpop.f32.mrb[0].mxu0
        %1390 = vdwg.mxu0
        %v1392 = vsel %vm1039, %v1146, 0
        %v1395 = vsel %vm1039, %v1147, 0
        %1397 = vmatprep.subr.mxu0 0.0
        %1398 = vmatpush1.msra.mxu0 %v693
        %1399 = vmatprep.subr.mxu0 0.0
        %1400 = vmatpush1.msra.mxu0 %v695
        %1401 = vmatprep.subr.mxu0 0.0
        %1402 = vmatpush1.msra.mxu0 0.0
        %1403 = vmatprep.subr.mxu0 0.0
        %1404 = vmatpush1.msra.mxu0 0.0
        %1405 = vmatprep.subr.mxu0 0.0
        %1406 = vmatpush1.msra.mxu0 0.0
        %1407 = vmatprep.subr.mxu0 0.0
        %1408 = vmatpush1.msra.mxu0 0.0
        %1409 = vmatprep.subr.mxu0 0.0
        %1410 = vmatpush1.msra.mxu0 0.0
        %1411 = vmatprep.subr.mxu0 0.0
        %1412 = vmatpush1.msra.mxu0 0.0
        %1413 = vmatprep.subr.mxu0 0.0
        %1414 = vmatpush1.msra.mxu0 0.0
        %1415 = vmatprep.subr.mxu0 0.0
        %1416 = vmatpush1.msra.mxu0 0.0
        %1417 = vmatprep.subr.mxu0 0.0
        %1418 = vmatpush1.msra.mxu0 0.0
        %1419 = vmatprep.subr.mxu0 0.0
        %1420 = vmatpush1.msra.mxu0 0.0
        %1421 = vmatprep.subr.mxu0 0.0
        %1422 = vmatpush1.msra.mxu0 0.0
        %1423 = vmatprep.subr.mxu0 0.0
        %1424 = vmatpush1.msra.mxu0 0.0
        %1425 = vmatprep.subr.mxu0 0.0
        %1426 = vmatpush1.msra.mxu0 0.0
        %1427 = vmatprep.subr.mxu0 0.0
        %1428 = vmatpush1.msra.mxu0 0.0
        %1429 = vmatprep.subr.mxu0 0.0
        %1430 = vmatpush1.msra.mxu0 0.0
        %1431 = vmatprep.subr.mxu0 0.0
        %1432 = vmatpush1.msra.mxu0 0.0
        %1433 = vmatprep.subr.mxu0 0.0
        %1434 = vmatpush1.msra.mxu0 0.0
        %1435 = vmatprep.subr.mxu0 0.0
        %1436 = vmatpush1.msra.mxu0 0.0
        %1437 = vmatprep.subr.mxu0 0.0
        %1438 = vmatpush1.msra.mxu0 0.0
        %1439 = vmatprep.subr.mxu0 0.0
        %1440 = vmatpush1.msra.mxu0 0.0
        %1441 = vmatprep.subr.mxu0 0.0
        %1442 = vmatpush1.msra.mxu0 0.0
        %1443 = vmatprep.subr.mxu0 0.0
        %1444 = vmatpush1.msra.mxu0 0.0
        %1445 = vmatprep.subr.mxu0 0.0
        %1446 = vmatpush1.msra.mxu0 0.0
        %1447 = vmatprep.subr.mxu0 0.0
        %1448 = vmatpush1.msra.mxu0 0.0
        %1449 = vmatprep.subr.mxu0 0.0
        %1450 = vmatpush1.msra.mxu0 0.0
        %1451 = vmatprep.subr.mxu0 0.0
        %1452 = vmatpush1.msra.mxu0 0.0
        %1453 = vmatprep.subr.mxu0 0.0
        %1454 = vmatpush1.msra.mxu0 0.0
        %1455 = vmatprep.subr.mxu0 0.0
        %1456 = vmatpush1.msra.mxu0 0.0
        %1457 = vmatprep.subr.mxu0 0.0
        %1458 = vmatpush1.msra.mxu0 0.0
        %1459 = vmatprep.subr.mxu0 0.0
        %1460 = vmatpush1.msra.mxu0 0.0
        %1461 = vmatprep.mubr.f32.mxu0 0.0
        %1462 = vmatmul.mubr.f32.gmra.mrb[0].mxu0 %v1392
        %v1463 = vpop.f32.mrb[0].mxu0
        %v1464 = vadd.f32 0.0, %v1463
        %v1465 = vpop.f32.mrb[0].mxu0
        %1466 = vmatprep.mubr.f32.mxu0 0.0
        %1467 = vmatmul.mubr.f32.gmra.mrb[0].mxu0 %v1395
        %v1468 = vpop.f32.mrb[0].mxu0
        %v1469 = vadd.f32 0.0, %v1468
        %v1470 = vpop.f32.mrb[0].mxu0
        %1471 = vdwg.mxu0
        %1474 = vrot.lane.b32.xlu0 %v1302, 32
        %v1475 = vpop.permute.xlu0 %1474
        %1476 = vrot.lane.b32.xlu0 %v1307, 32
        %v1477 = vpop.permute.xlu0 %1476
        %1482 = vrot.lane.b32.xlu0 %v1383, 64
        %v1483 = vpop.permute.xlu0 %1482
        %1484 = vrot.lane.b32.xlu0 %v1388, 64
        %v1485 = vpop.permute.xlu0 %1484
        %1490 = vrot.lane.b32.xlu0 %v1464, 96
        %v1491 = vpop.permute.xlu0 %1490
        %1492 = vrot.lane.b32.xlu0 %v1469, 96
        %v1493 = vpop.permute.xlu0 %1492
        %v1496 = vsel %vm698, %v1221, %v1475
        %v1497 = vsel %vm698, %v1226, %v1477
        %vm1498 = vcmask 523264
        %v1499 = vsel %vm1498, %v1496, %v1483
        %v1500 = vsel %vm1498, %v1497, %v1485
        %vm1501 = vcmask 785408
        %v1502 = vsel %vm1501, %v1499, %v1491
        %v1503 = vsel %vm1501, %v1500, %v1493
        %v1504 = vlaneseq
        %v1505 = vshrl.u32 %v1504, 7
        %v1506 = vsub.s32 3, %v1505
        %v1507 = vrot.slane %v339, %v1506
        %1508 = vmatprep.subr.mxu0 0.0
        %1509 = vmatpush1.msra.mxu0 %v391
        %1510 = vmatprep.subr.mxu0 0.0
        %1511 = vmatpush1.msra.mxu0 %v392
        %1512 = vmatprep.subr.mxu0 0.0
        %1513 = vmatpush1.msra.mxu0 %v393
        %1514 = vmatprep.subr.mxu0 0.0
        %1515 = vmatpush1.msra.mxu0 %v394
        %1516 = vmatprep.subr.mxu0 0.0
        %1517 = vmatpush1.msra.mxu0 %v395
        %1518 = vmatprep.subr.mxu0 0.0
        %1519 = vmatpush1.msra.mxu0 %v396
        %1520 = vmatprep.subr.mxu0 0.0
        %1521 = vmatpush1.msra.mxu0 %v397
        %1522 = vmatprep.subr.mxu0 0.0
        %1523 = vmatpush1.msra.mxu0 %v398
        %1524 = vmatprep.subr.mxu0 0.0
        %1525 = vmatpush1.msra.mxu0 %v399
        %1526 = vmatprep.subr.mxu0 0.0
        %1527 = vmatpush1.msra.mxu0 %v400
        %1528 = vmatprep.subr.mxu0 0.0
        %1529 = vmatpush1.msra.mxu0 %v401
        %1530 = vmatprep.subr.mxu0 0.0
        %1531 = vmatpush1.msra.mxu0 %v402
        %1532 = vmatprep.subr.mxu0 0.0
        %1533 = vmatpush1.msra.mxu0 %v403
        %1534 = vmatprep.subr.mxu0 0.0
        %1535 = vmatpush1.msra.mxu0 %v404
        %1536 = vmatprep.subr.mxu0 0.0
        %1537 = vmatpush1.msra.mxu0 %v405
        %1538 = vmatprep.subr.mxu0 0.0
        %1539 = vmatpush1.msra.mxu0 %v406
        %1540 = vmatprep.subr.mxu0 0.0
        %1541 = vmatpush1.msra.mxu0 0.0
        %1542 = vmatprep.subr.mxu0 0.0
        %1543 = vmatpush1.msra.mxu0 0.0
        %1544 = vmatprep.subr.mxu0 0.0
        %1545 = vmatpush1.msra.mxu0 0.0
        %1546 = vmatprep.subr.mxu0 0.0
        %1547 = vmatpush1.msra.mxu0 0.0
        %1548 = vmatprep.subr.mxu0 0.0
        %1549 = vmatpush1.msra.mxu0 0.0
        %1550 = vmatprep.subr.mxu0 0.0
        %1551 = vmatpush1.msra.mxu0 0.0
        %1552 = vmatprep.subr.mxu0 0.0
        %1553 = vmatpush1.msra.mxu0 0.0
        %1554 = vmatprep.subr.mxu0 0.0
        %1555 = vmatpush1.msra.mxu0 0.0
        %1556 = vmatprep.subr.mxu0 0.0
        %1557 = vmatpush1.msra.mxu0 0.0
        %1558 = vmatprep.subr.mxu0 0.0
        %1559 = vmatpush1.msra.mxu0 0.0
        %1560 = vmatprep.subr.mxu0 0.0
        %1561 = vmatpush1.msra.mxu0 0.0
        %1562 = vmatprep.subr.mxu0 0.0
        %1563 = vmatpush1.msra.mxu0 0.0
        %1564 = vmatprep.subr.mxu0 0.0
        %1565 = vmatpush1.msra.mxu0 0.0
        %1566 = vmatprep.subr.mxu0 0.0
        %1567 = vmatpush1.msra.mxu0 0.0
        %1568 = vmatprep.subr.mxu0 0.0
        %1569 = vmatpush1.msra.mxu0 0.0
        %1570 = vmatprep.subr.mxu0 0.0
        %1571 = vmatpush1.msra.mxu0 0.0
        %1572 = vmatprep.mubr.f32.mxu0 0.0
        %1573 = vmatmul.mubr.f32.gmra.mrb[0].mxu0 %v1502
        %v1574 = vpop.f32.mrb[0].mxu0
        %v1575 = vadd.f32 %v1507, %v1574
        %v1576 = vpop.f32.mrb[0].mxu0
        %1577 = vmatprep.mubr.f32.mxu0 0.0
        %1578 = vmatmul.mubr.f32.gmra.mrb[0].mxu0 %v1503
        %v1579 = vpop.f32.mrb[0].mxu0
        %v1580 = vadd.f32 %v1507, %v1579
        %v1581 = vpop.f32.mrb[0].mxu0
        %1582 = vdwg.mxu0
        %1583 = vst [vmem:[%s334] sm:$0xff] %v1575
        %1584 = vst [vmem:[%s334 + $0x8] sm:$0xff] %v1580
        %s1585 = sand.u32 %s154, 1
        %s1586 = scalar_lea.sflag [#allocation4], %s1585
        %s1587 = sand.u32 %s154, 1
        %s1588 = smul.addr %s1587, 16
        %s1589 = scalar_lea.vmem [#allocation10], %s1588
        // Predicated region
        $region57: #{multi_head_attention.1} parent=39 // pred_check
          %p1590 = pneg %p164
        $region58: #{multi_head_attention.1} parent=39 // pred_check_branch
          %1592 = sbr.rel (%p1590) target = $region60
        $region59: #{multi_head_attention.1} parent=39 // pred_region
          %s1593 = smul.u32 2, %s26
          %s1595 = ssub.s32 256, 256
          %1596 = vsyncadd %s1586, %s1595
          %s1597 = smul.addr %s1593, 128
          %s1598 = scalar_lea.hbm %s5, %s1597
          %s1599 = sshll.u32 %s1589, 4
          %s1600 = int_to_ptr.vmem [resolvable:$true] %s1599
          %1605 = dma.vmem_to_hbm [thread:$0]  %s1600, 256, %s1598, %s1586, 128, 128, 8
        $region60: #{multi_head_attention.1} parent=39 // pred_fallthru
          _
      $region40: #{multi_head_attention.1} parent=5 // pred_fallthru
        _
      %p1606 = scmp.le.s32.totalorder 2, %s21
      // Predicated region
      $region61: #{multi_head_attention.1} parent=5 // pred_check
        %p1607 = pneg %p1606
      $region62: #{multi_head_attention.1} parent=5 // pred_check_branch
        %1609 = sbr.rel (%p1607) target = $region64
      $region63: #{multi_head_attention.1} parent=5 // pred_region
        %s1610 = ssub.s32 %s21, 2
        // Predicated region
        $region65: #{multi_head_attention.1} parent=63 // pred_check
          %p1611 = pneg %p170
        $region66: #{multi_head_attention.1} parent=63 // pred_check_branch
          %1613 = sbr.rel (%p1611) target = $region68
        $region67: #{multi_head_attention.1} parent=63 // pred_region
          %s1614 = sand.u32 %s155, 1
          %s1615 = scalar_lea.sflag [#allocation4], %s1614
          %s1616 = sand.u32 %s155, 1
          %s1617 = smul.addr %s1616, 16
          %s1618 = scalar_lea.vmem [#allocation10], %s1617
          %1619 = dma.done %s1615, 256
        $region68: #{multi_head_attention.1} parent=63 // pred_fallthru
          _
      $region64: #{multi_head_attention.1} parent=5 // pred_fallthru
        _
    $region6: #{multi_head_attention.1} parent=1 // loop_footer
      %s25 = sadd.s32 1, %s21
    $region7: #{multi_head_attention.1} parent=1 // loop_footer_branch
      %20 = sbr.rel target = $region3
    $region8: #{multi_head_attention.1} parent=1 // loop_exit
      _
    %1620 = vsyncpa [#allocation3], 1
    %s1621 = scalar_lea.sflag [#allocation3], 1
    %1622 = vsyncpa %s1621, 1
    %1623 = vsyncpa [#allocation6], 1
    %s1624 = scalar_lea.sflag [#allocation6], 1
    %1625 = vsyncpa %s1624, 1
    %1626 = vsyncpa [#allocation9], 1
    %1627 = vsyncpa [#allocation4], 1
    %s1628 = scalar_lea.sflag [#allocation4], 1
    %1629 = vsyncpa %s1628, 1

</llo_original>
